<compile_context>
chip_gen: v5e
topology: v5e:2x2
jax: 0.10.0
libtpu: 0.0.40
codegen_flags: <defaults>
</compile_context>

<pallas_src>
import functools

import jax
import jax.numpy as jnp
import numpy as np
from jax.experimental import pallas as pl
from jax.experimental.pallas import tpu as pltpu


def _wavenet_kernel(x_ref,
                    w0_ref, b0_ref,
                    wd_ref, bd_ref,
                    wrs_ref, brs_ref,
                    wf1_ref, bf1_ref,
                    wf2_ref, bf2_ref,
                    o_ref,
                    *, dilations, TB, S, R, SK):
    M = TB * S
    dt = jnp.bfloat16
    f32 = jnp.float32

    # start_conv (1x1): one (M, Cin) @ (Cin, R) matmul; f32 accumulation.
    h = jnp.dot(x_ref[...], w0_ref[...], preferred_element_type=f32) + b0_ref[...]

    # Row position inside its sequence (hoisted); boundary masks hoisted and
    # built once per unique dilation (JAX does not CSE repeated compares).
    pos = jax.lax.broadcasted_iota(jnp.int32, (M, R), 0) % S
    left_masks, right_masks = {}, {}
    for d in dilations:
        left, right = d // 2, d - d // 2
        if left > 0 and left not in left_masks:
            left_masks[left] = pos >= left
        if right not in right_masks:
            right_masks[right] = pos < S - right

    skip_sum = jnp.zeros((M, SK), f32)

    for i, d in enumerate(dilations):
        # PyTorch Conv1d(k=2, dilation=d, padding='same'):
        #   left = d // 2 zeros, right = d - left zeros
        #   out[t] = W[...,0] @ h[t - left] + W[...,1] @ h[t + right] + bias
        left = d // 2
        right = d - left

        # tap0[r] = h[r - left]  (zero past the left sequence edge)
        if left == 0:
            tap0 = h
        else:
            tap0 = jnp.where(left_masks[left], pltpu.roll(h, left, axis=0), 0.0)
        # tap1[r] = h[r + right] (zero past the right sequence edge; the mask
        # also kills rows that wrapped across a batch boundary).
        tap1 = jnp.where(right_masks[right], pltpu.roll(h, M - right, axis=0), 0.0)

        # Dilated conv as two accumulating (M,R)@(R,D) matmuls (no lane concat).
        g = (jnp.dot(tap0.astype(dt), wd_ref[i, 0], preferred_element_type=f32)
             + jnp.dot(tap1.astype(dt), wd_ref[i, 1], preferred_element_type=f32)
             + bd_ref[i])
        g = jnp.maximum(g, 0.0).astype(dt)                           # relu

        # Fused residual + skip 1x1 convs: (M,D)@(D,R+SK), split on lanes.
        rs = jnp.dot(g, wrs_ref[i], preferred_element_type=f32) + brs_ref[i]
        h = h + rs[:, :R]                                            # residual add
        skip_sum = skip_sum + rs[:, R:]                              # stack(...).sum(0)

    s = jnp.maximum(skip_sum, 0.0)
    f1 = jnp.dot(s.astype(dt), wf1_ref[...], preferred_element_type=f32) + bf1_ref[...]
    f1 = jnp.maximum(f1, 0.0)
    # TODO(synk): nn.Dropout is identity at inference; training-mode RNG masking
    # not implemented.

    # Exact head fold: mean_s(final_conv2(f1)) == final_conv2(mean_s(f1)).
    # Sequence mean as an f32 sublane/XLU reduction; no O(TB^2*S) mean-matrix.
    pooled = jnp.mean(f1.reshape(TB, S, SK), axis=1)                 # (TB, SK) f32
    o_ref[...] = (jnp.dot(pooled, wf2_ref[...], preferred_element_type=f32)
                  + bf2_ref[...])                                    # (TB, 1)


def _full_block(a):
    """Whole-array-in-VMEM BlockSpec, constant across the (batch) grid."""
    nd = a.ndim

    def index_map(i):
        return (0,) * nd

    return pl.BlockSpec(a.shape, index_map)


def wavenet_forward(x, params, *, batch_tile=None, vmem_limit_bytes=None):
    """x: (B, S, input_channels) float32 -> (B, 1) float32."""
    B, S, Cin = x.shape
    R = params["w0"].shape[1]
    SK = params["wrs"].shape[2] - R

    # One grid step per batch tile; tile defaults to the whole batch.
    # For v7x pick batch_tile = B // 2 (or smaller) so the "parallel" grid has
    # >= 2 steps and both TensorCores are used; keep the step count small
    # (2-8) since each step costs ~0.35 us and re-presents the weights.
    TB = B if batch_tile is None else batch_tile
    assert B % TB == 0, "batch_tile must divide batch"
    if TB != B:
        # (8,128) rule: sub-batch blocks need sublane-aligned shapes.
        assert TB % 8 == 0, "batch_tile must be a multiple of 8 when < batch"
        assert (TB * S) % 8 == 0

    grid = (B // TB,)

    # bf16 input: halves DMA bytes and the lane-padded (to 128) VMEM footprint
    # of the double-buffered x block; accumulation stays f32 in the kernel.
    x_flat = x.reshape(B * S, Cin).astype(jnp.bfloat16)

    weights = (params["w0"], params["b0"],
               params["wd"], params["bd"],
               params["wrs"], params["brs"],
               params["wf1"], params["bf1"],
               params["wf2"], params["bf2"])

    if vmem_limit_bytes is None:
        # Rough per-row working set (h/taps/g/rs/skip f32 + padded x block,
        # double-buffered) plus resident weights; clamp to a safe range.
        weight_bytes = sum(int(np.prod(w.shape)) * w.dtype.itemsize for w in weights)
        est = TB * S * 1536 + 2 * weight_bytes + (8 << 20)
        vmem_limit_bytes = int(min(max(est, 32 << 20), 100 << 20))

    kernel = functools.partial(
        _wavenet_kernel,
        dilations=params["dilations"], TB=TB, S=S, R=R, SK=SK)

    in_specs = ([pl.BlockSpec((TB * S, Cin), lambda i: (i, 0))]
                + [_full_block(w) for w in weights])

    return pl.pallas_call(
        kernel,
        grid=grid,
        out_shape=jax.ShapeDtypeStruct((B, 1), jnp.float32),
        in_specs=in_specs,
        out_specs=pl.BlockSpec((TB, 1), lambda i: (i, 0)),
        compiler_params=pltpu.CompilerParams(
            dimension_semantics=("parallel",),
            vmem_limit_bytes=vmem_limit_bytes),
    )(x_flat, *weights)


def _xavier_uniform(key, shape, fan_in, fan_out, gain=0.1):
    bound = gain * float(np.sqrt(6.0 / (fan_in + fan_out)))
    return jax.random.uniform(key, shape, jnp.float32, -bound, bound)


def init_params(key, input_channels, residual_channels=32, dilation_channels=32,
                skip_channels=32, output_channels=1, layers=3, blocks=2):
    """xavier_uniform(gain=0.1) weights, zero biases (matches _init_weights).

    Matmul weights are stored pre-shaped for the kernel and (except the tiny
    head matrix) in bf16; biases stay f32.
    """
    R, D, SK = residual_channels, dilation_channels, skip_channels
    L = layers * blocks
    dilations = tuple(2 ** l for _ in range(blocks) for l in range(layers))
    keys = jax.random.split(key, 3 + 3 * L)
    ki = iter(keys)
    bf16 = jnp.bfloat16
    p = {"dilations": dilations}

    # start_conv: Conv1d(Cin, R, 1) -> matrix (Cin, R)
    p["w0"] = _xavier_uniform(next(ki), (input_channels, R),
                              input_channels, R).astype(bf16)
    p["b0"] = jnp.zeros((1, R), jnp.float32)

    wd, wrs = [], []
    for _ in range(L):
        # dilated conv: Conv1d(R, D, k=2); fan_in = R*2, fan_out = D*2
        wd.append(_xavier_uniform(next(ki), (2, R, D), R * 2, D * 2))   # (2, R, D)
        wr = _xavier_uniform(next(ki), (D, R), D, R)
        ws = _xavier_uniform(next(ki), (D, SK), D, SK)
        wrs.append(jnp.concatenate([wr, ws], axis=1))                   # (D, R+SK)
    p["wd"] = jnp.stack(wd).astype(bf16)                                # (L, 2, R, D)
    p["bd"] = jnp.zeros((L, 1, D), jnp.float32)
    p["wrs"] = jnp.stack(wrs).astype(bf16)                              # (L, D, R+SK)
    p["brs"] = jnp.zeros((L, 1, R + SK), jnp.float32)

    p["wf1"] = _xavier_uniform(next(ki), (SK, SK), SK, SK).astype(bf16)
    p["bf1"] = jnp.zeros((1, SK), jnp.float32)
    # Head matrix kept f32: the pooled dot is done entirely in f32.
    p["wf2"] = _xavier_uniform(next(ki), (SK, output_channels),
                               SK, output_channels).astype(jnp.float32)
    p["bf2"] = jnp.zeros((1, output_channels), jnp.float32)
    return p


def wavenet_reference(x, p):
    """Pure-JAX f32 reference with the PyTorch module's semantics."""
    B, S, _ = x.shape
    R = p["w0"].shape[1]
    SK = p["wrs"].shape[2] - R
    f32 = jnp.float32
    h = jnp.einsum("bsc,cd->bsd", x, p["w0"].astype(f32)) + p["b0"]
    skip_sum = jnp.zeros((B, S, SK), f32)
    for i, d in enumerate(p["dilations"]):
        left = d // 2
        right = d - left
        hp = jnp.pad(h, ((0, 0), (left, right), (0, 0)))
        tap0 = hp[:, 0:S, :]
        tap1 = hp[:, d:d + S, :]
        wdi = p["wd"][i].astype(f32)
        g = jax.nn.relu(jnp.einsum("bsc,cd->bsd", tap0, wdi[0])
                        + jnp.einsum("bsc,cd->bsd", tap1, wdi[1]) + p["bd"][i])
        rs = jnp.einsum("bsc,cd->bsd", g, p["wrs"][i].astype(f32)) + p["brs"][i]
        h = h + rs[..., :R]
        skip_sum = skip_sum + rs[..., R:]
    s = jax.nn.relu(skip_sum)
    f1 = jax.nn.relu(jnp.einsum("bsc,cd->bsd", s, p["wf1"].astype(f32)) + p["bf1"])
    f2 = jnp.einsum("bsc,cd->bsd", f1, p["wf2"].astype(f32)) + p["bf2"]
    return jnp.mean(f2, axis=1)  # (B, 1)


if __name__ == "__main__":
    key = jax.random.PRNGKey(0)
    kx, kp = jax.random.split(key)
    B, S, C_IN = 2, 16, 4
    x = jax.random.normal(kx, (B, S, C_IN), jnp.float32)
    params = init_params(kp, C_IN)

    out = jax.block_until_ready(wavenet_forward(x, params))
    assert out.shape == (B, 1)

    ref = wavenet_reference(x, params)
    np.testing.assert_allclose(np.asarray(out), np.asarray(ref), rtol=5e-2, atol=1e-3)

    print("KERNEL_OK")
</pallas_src>

<mosaic_0001>
module attributes {stable_mosaic.version = 11 : i64} {
  func.func @_wavenet_kernel(%arg0: i32, %arg1: memref<32x4xbf16, #tpu.memory_space<vmem>>, %arg2: memref<4x32xbf16, #tpu.memory_space<vmem>>, %arg3: memref<1x32xf32, #tpu.memory_space<vmem>>, %arg4: memref<6x2x32x32xbf16, #tpu.memory_space<vmem>>, %arg5: memref<6x1x32xf32, #tpu.memory_space<vmem>>, %arg6: memref<6x32x64xbf16, #tpu.memory_space<vmem>>, %arg7: memref<6x1x64xf32, #tpu.memory_space<vmem>>, %arg8: memref<32x32xbf16, #tpu.memory_space<vmem>>, %arg9: memref<1x32xf32, #tpu.memory_space<vmem>>, %arg10: memref<32x1xf32, #tpu.memory_space<vmem>>, %arg11: memref<1x1xf32, #tpu.memory_space<vmem>>, %arg12: memref<2x1xf32, #tpu.memory_space<vmem>>) attributes {dimension_semantics = [#tpu.dimension_semantics<parallel>], iteration_bounds = array<i64: 1>, scalar_prefetch = 0 : i64, scratch_operands = 0 : i64, tpu.core_type = #tpu.core_type<tc>, window_params = [{transform_indices = @transform_0, window_bounds = array<i64: 32, 4>}, {pipeline_mode = #tpu.pipeline_mode<synchronous>, transform_indices = @transform_1, window_bounds = array<i64: 4, 32>}, {pipeline_mode = #tpu.pipeline_mode<synchronous>, transform_indices = @transform_2, window_bounds = array<i64: 1, 32>}, {pipeline_mode = #tpu.pipeline_mode<synchronous>, transform_indices = @transform_3, window_bounds = array<i64: 6, 2, 32, 32>}, {pipeline_mode = #tpu.pipeline_mode<synchronous>, transform_indices = @transform_4, window_bounds = array<i64: 6, 1, 32>}, {pipeline_mode = #tpu.pipeline_mode<synchronous>, transform_indices = @transform_5, window_bounds = array<i64: 6, 32, 64>}, {pipeline_mode = #tpu.pipeline_mode<synchronous>, transform_indices = @transform_6, window_bounds = array<i64: 6, 1, 64>}, {pipeline_mode = #tpu.pipeline_mode<synchronous>, transform_indices = @transform_7, window_bounds = array<i64: 32, 32>}, {pipeline_mode = #tpu.pipeline_mode<synchronous>, transform_indices = @transform_8, window_bounds = array<i64: 1, 32>}, {pipeline_mode = #tpu.pipeline_mode<synchronous>, transform_indices = @transform_9, window_bounds = array<i64: 32, 1>}, {pipeline_mode = #tpu.pipeline_mode<synchronous>, transform_indices = @transform_10, window_bounds = array<i64: 1, 1>}, {transform_indices = @transform_11, window_bounds = array<i64: 2, 1>}]} {
    %c0 = arith.constant 0 : index
    %c0_0 = arith.constant 0 : index
    %0 = vector.load %arg1[%c0, %c0_0] : memref<32x4xbf16, #tpu.memory_space<vmem>>, vector<32x4xbf16>
    %c0_1 = arith.constant 0 : index
    %c0_2 = arith.constant 0 : index
    %1 = vector.load %arg2[%c0_1, %c0_2] : memref<4x32xbf16, #tpu.memory_space<vmem>>, vector<4x32xbf16>
    %cst = arith.constant dense<0.000000e+00> : vector<32x32xf32>
    %2 = tpu.matmul %0, %1, %cst {dimension_numbers = #tpu.dot_dimension_numbers<[1], [0], [0], [1], [0, 0, 1, 1], [], []>} : vector<32x4xbf16>, vector<4x32xbf16>, vector<32x32xf32> -> vector<32x32xf32>
    %c0_3 = arith.constant 0 : index
    %c0_4 = arith.constant 0 : index
    %3 = vector.load %arg3[%c0_3, %c0_4] : memref<1x32xf32, #tpu.memory_space<vmem>>, vector<1x32xf32>
    %4 = vector.broadcast %3 : vector<1x32xf32> to vector<32x32xf32>
    %5 = arith.addf %2, %4 : vector<32x32xf32>
    %6 = tpu.iota {dimensions = array<i32: 0>} : vector<32x32xi32>
    %c16_i32 = arith.constant 16 : i32
    %c0_i32 = arith.constant 0 : i32
    %7 = arith.cmpi eq, %c16_i32, %c0_i32 : i32
    %c1_i32 = arith.constant 1 : i32
    %8 = arith.select %7, %c1_i32, %c16_i32 : i32
    %9 = vector.broadcast %8 : i32 to vector<32x32xi32>
    %10 = arith.remsi %6, %9 : vector<32x32xi32>
    %c0_i32_5 = arith.constant 0 : i32
    %11 = vector.broadcast %c0_i32_5 : i32 to vector<32x32xi32>
    %12 = arith.cmpi ne, %10, %11 : vector<32x32xi32>
    %c0_i32_6 = arith.constant 0 : i32
    %13 = vector.broadcast %c0_i32_6 : i32 to vector<32x32xi32>
    %14 = arith.cmpi slt, %10, %13 : vector<32x32xi32>
    %c0_i32_7 = arith.constant 0 : i32
    %15 = arith.cmpi slt, %8, %c0_i32_7 : i32
    %16 = vector.broadcast %15 : i1 to vector<32x32xi1>
    %17 = vector.broadcast %16 : vector<32x32xi1> to vector<32x32xi1>
    %18 = arith.xori %14, %17 : vector<32x32xi1>
    %19 = arith.andi %18, %12 : vector<32x32xi1>
    %20 = vector.broadcast %8 : i32 to vector<32x32xi32>
    %21 = arith.addi %10, %20 : vector<32x32xi32>
    %22 = arith.select %19, %21, %10 : vector<32x32xi1>, vector<32x32xi32>
    %c15_i32 = arith.constant 15 : i32
    %23 = vector.broadcast %c15_i32 : i32 to vector<32x32xi32>
    %24 = arith.cmpi slt, %22, %23 : vector<32x32xi32>
    %c1_i32_8 = arith.constant 1 : i32
    %25 = vector.broadcast %c1_i32_8 : i32 to vector<32x32xi32>
    %26 = arith.cmpi sge, %22, %25 : vector<32x32xi32>
    %c2_i32 = arith.constant 2 : i32
    %27 = vector.broadcast %c2_i32 : i32 to vector<32x32xi32>
    %28 = arith.cmpi sge, %22, %27 : vector<32x32xi32>
    %c14_i32 = arith.constant 14 : i32
    %29 = vector.broadcast %c14_i32 : i32 to vector<32x32xi32>
    %30 = arith.cmpi slt, %22, %29 : vector<32x32xi32>
    %cst_9 = arith.constant 0.000000e+00 : f32
    %31 = vector.broadcast %cst_9 : f32 to vector<32x32xf32>
    %c31_i32 = arith.constant 31 : i32
    %32 = tpu.dynamic_rotate %5 by %c31_i32 dim 0 : vector<32x32xf32>, i32 -> vector<32x32xf32>
    %cst_10 = arith.constant 0.000000e+00 : f32
    %33 = vector.broadcast %cst_10 : f32 to vector<32x32xf32>
    %34 = arith.select %24, %32, %33 : vector<32x32xi1>, vector<32x32xf32>
    %35 = arith.truncf %5 : vector<32x32xf32> to vector<32x32xbf16>
    %c0_11 = arith.constant 0 : index
    %c0_12 = arith.constant 0 : index
    %c0_13 = arith.constant 0 : index
    %c0_14 = arith.constant 0 : index
    %36 = vector.load %arg4[%c0_11, %c0_12, %c0_13, %c0_14] : memref<6x2x32x32xbf16, #tpu.memory_space<vmem>>, vector<1x1x32x32xbf16>
    %37 = vector.shape_cast %36 : vector<1x1x32x32xbf16> to vector<32x32xbf16>
    %cst_15 = arith.constant dense<0.000000e+00> : vector<32x32xf32>
    %38 = tpu.matmul %35, %37, %cst_15 {dimension_numbers = #tpu.dot_dimension_numbers<[1], [0], [0], [1], [0, 0, 1, 1], [], []>} : vector<32x32xbf16>, vector<32x32xbf16>, vector<32x32xf32> -> vector<32x32xf32>
    %39 = arith.truncf %34 : vector<32x32xf32> to vector<32x32xbf16>
    %c0_16 = arith.constant 0 : index
    %c1 = arith.constant 1 : index
    %c0_17 = arith.constant 0 : index
    %c0_18 = arith.constant 0 : index
    %40 = vector.load %arg4[%c0_16, %c1, %c0_17, %c0_18] : memref<6x2x32x32xbf16, #tpu.memory_space<vmem>>, vector<1x1x32x32xbf16>
    %41 = vector.shape_cast %40 : vector<1x1x32x32xbf16> to vector<32x32xbf16>
    %cst_19 = arith.constant dense<0.000000e+00> : vector<32x32xf32>
    %42 = tpu.matmul %39, %41, %cst_19 {dimension_numbers = #tpu.dot_dimension_numbers<[1], [0], [0], [1], [0, 0, 1, 1], [], []>} : vector<32x32xbf16>, vector<32x32xbf16>, vector<32x32xf32> -> vector<32x32xf32>
    %43 = arith.addf %38, %42 : vector<32x32xf32>
    %c0_20 = arith.constant 0 : index
    %c0_21 = arith.constant 0 : index
    %c0_22 = arith.constant 0 : index
    %44 = vector.load %arg5[%c0_20, %c0_21, %c0_22] : memref<6x1x32xf32, #tpu.memory_space<vmem>>, vector<1x1x32xf32>
    %45 = vector.shape_cast %44 : vector<1x1x32xf32> to vector<1x32xf32>
    %46 = vector.broadcast %45 : vector<1x32xf32> to vector<32x32xf32>
    %47 = arith.addf %43, %46 : vector<32x32xf32>
    %cst_23 = arith.constant 0.000000e+00 : f32
    %48 = vector.broadcast %cst_23 : f32 to vector<32x32xf32>
    %49 = arith.maximumf %47, %48 : vector<32x32xf32>
    %50 = arith.truncf %49 : vector<32x32xf32> to vector<32x32xbf16>
    %c0_24 = arith.constant 0 : index
    %c0_25 = arith.constant 0 : index
    %c0_26 = arith.constant 0 : index
    %51 = vector.load %arg6[%c0_24, %c0_25, %c0_26] : memref<6x32x64xbf16, #tpu.memory_space<vmem>>, vector<1x32x64xbf16>
    %52 = vector.shape_cast %51 : vector<1x32x64xbf16> to vector<32x64xbf16>
    %cst_27 = arith.constant dense<0.000000e+00> : vector<32x64xf32>
    %53 = tpu.matmul %50, %52, %cst_27 {dimension_numbers = #tpu.dot_dimension_numbers<[1], [0], [0], [1], [0, 0, 1, 1], [], []>} : vector<32x32xbf16>, vector<32x64xbf16>, vector<32x64xf32> -> vector<32x64xf32>
    %c0_28 = arith.constant 0 : index
    %c0_29 = arith.constant 0 : index
    %c0_30 = arith.constant 0 : index
    %54 = vector.load %arg7[%c0_28, %c0_29, %c0_30] : memref<6x1x64xf32, #tpu.memory_space<vmem>>, vector<1x1x64xf32>
    %55 = vector.shape_cast %54 : vector<1x1x64xf32> to vector<1x64xf32>
    %56 = vector.broadcast %55 : vector<1x64xf32> to vector<32x64xf32>
    %57 = arith.addf %53, %56 : vector<32x64xf32>
    %58 = vector.extract_strided_slice %57 {offsets = [0, 0], sizes = [32, 32], strides = [1, 1]} : vector<32x64xf32> to vector<32x32xf32>
    %59 = arith.addf %5, %58 : vector<32x32xf32>
    %60 = vector.extract_strided_slice %57 {offsets = [0, 32], sizes = [32, 32], strides = [1, 1]} : vector<32x64xf32> to vector<32x32xf32>
    %61 = arith.addf %31, %60 : vector<32x32xf32>
    %c1_i32_31 = arith.constant 1 : i32
    %62 = tpu.dynamic_rotate %59 by %c1_i32_31 dim 0 : vector<32x32xf32>, i32 -> vector<32x32xf32>
    %cst_32 = arith.constant 0.000000e+00 : f32
    %63 = vector.broadcast %cst_32 : f32 to vector<32x32xf32>
    %64 = arith.select %26, %62, %63 : vector<32x32xi1>, vector<32x32xf32>
    %c31_i32_33 = arith.constant 31 : i32
    %65 = tpu.dynamic_rotate %59 by %c31_i32_33 dim 0 : vector<32x32xf32>, i32 -> vector<32x32xf32>
    %cst_34 = arith.constant 0.000000e+00 : f32
    %66 = vector.broadcast %cst_34 : f32 to vector<32x32xf32>
    %67 = arith.select %24, %65, %66 : vector<32x32xi1>, vector<32x32xf32>
    %68 = arith.truncf %64 : vector<32x32xf32> to vector<32x32xbf16>
    %c1_35 = arith.constant 1 : index
    %c0_36 = arith.constant 0 : index
    %c0_37 = arith.constant 0 : index
    %c0_38 = arith.constant 0 : index
    %69 = vector.load %arg4[%c1_35, %c0_36, %c0_37, %c0_38] : memref<6x2x32x32xbf16, #tpu.memory_space<vmem>>, vector<1x1x32x32xbf16>
    %70 = vector.shape_cast %69 : vector<1x1x32x32xbf16> to vector<32x32xbf16>
    %cst_39 = arith.constant dense<0.000000e+00> : vector<32x32xf32>
    %71 = tpu.matmul %68, %70, %cst_39 {dimension_numbers = #tpu.dot_dimension_numbers<[1], [0], [0], [1], [0, 0, 1, 1], [], []>} : vector<32x32xbf16>, vector<32x32xbf16>, vector<32x32xf32> -> vector<32x32xf32>
    %72 = arith.truncf %67 : vector<32x32xf32> to vector<32x32xbf16>
    %c1_40 = arith.constant 1 : index
    %c1_41 = arith.constant 1 : index
    %c0_42 = arith.constant 0 : index
    %c0_43 = arith.constant 0 : index
    %73 = vector.load %arg4[%c1_40, %c1_41, %c0_42, %c0_43] : memref<6x2x32x32xbf16, #tpu.memory_space<vmem>>, vector<1x1x32x32xbf16>
    %74 = vector.shape_cast %73 : vector<1x1x32x32xbf16> to vector<32x32xbf16>
    %cst_44 = arith.constant dense<0.000000e+00> : vector<32x32xf32>
    %75 = tpu.matmul %72, %74, %cst_44 {dimension_numbers = #tpu.dot_dimension_numbers<[1], [0], [0], [1], [0, 0, 1, 1], [], []>} : vector<32x32xbf16>, vector<32x32xbf16>, vector<32x32xf32> -> vector<32x32xf32>
    %76 = arith.addf %71, %75 : vector<32x32xf32>
    %c1_45 = arith.constant 1 : index
    %c0_46 = arith.constant 0 : index
    %c0_47 = arith.constant 0 : index
    %77 = vector.load %arg5[%c1_45, %c0_46, %c0_47] : memref<6x1x32xf32, #tpu.memory_space<vmem>>, vector<1x1x32xf32>
    %78 = vector.shape_cast %77 : vector<1x1x32xf32> to vector<1x32xf32>
    %79 = vector.broadcast %78 : vector<1x32xf32> to vector<32x32xf32>
    %80 = arith.addf %76, %79 : vector<32x32xf32>
    %cst_48 = arith.constant 0.000000e+00 : f32
    %81 = vector.broadcast %cst_48 : f32 to vector<32x32xf32>
    %82 = arith.maximumf %80, %81 : vector<32x32xf32>
    %83 = arith.truncf %82 : vector<32x32xf32> to vector<32x32xbf16>
    %c1_49 = arith.constant 1 : index
    %c0_50 = arith.constant 0 : index
    %c0_51 = arith.constant 0 : index
    %84 = vector.load %arg6[%c1_49, %c0_50, %c0_51] : memref<6x32x64xbf16, #tpu.memory_space<vmem>>, vector<1x32x64xbf16>
    %85 = vector.shape_cast %84 : vector<1x32x64xbf16> to vector<32x64xbf16>
    %cst_52 = arith.constant dense<0.000000e+00> : vector<32x64xf32>
    %86 = tpu.matmul %83, %85, %cst_52 {dimension_numbers = #tpu.dot_dimension_numbers<[1], [0], [0], [1], [0, 0, 1, 1], [], []>} : vector<32x32xbf16>, vector<32x64xbf16>, vector<32x64xf32> -> vector<32x64xf32>
    %c1_53 = arith.constant 1 : index
    %c0_54 = arith.constant 0 : index
    %c0_55 = arith.constant 0 : index
    %87 = vector.load %arg7[%c1_53, %c0_54, %c0_55] : memref<6x1x64xf32, #tpu.memory_space<vmem>>, vector<1x1x64xf32>
    %88 = vector.shape_cast %87 : vector<1x1x64xf32> to vector<1x64xf32>
    %89 = vector.broadcast %88 : vector<1x64xf32> to vector<32x64xf32>
    %90 = arith.addf %86, %89 : vector<32x64xf32>
    %91 = vector.extract_strided_slice %90 {offsets = [0, 0], sizes = [32, 32], strides = [1, 1]} : vector<32x64xf32> to vector<32x32xf32>
    %92 = arith.addf %59, %91 : vector<32x32xf32>
    %93 = vector.extract_strided_slice %90 {offsets = [0, 32], sizes = [32, 32], strides = [1, 1]} : vector<32x64xf32> to vector<32x32xf32>
    %94 = arith.addf %61, %93 : vector<32x32xf32>
    %c2_i32_56 = arith.constant 2 : i32
    %95 = tpu.dynamic_rotate %92 by %c2_i32_56 dim 0 : vector<32x32xf32>, i32 -> vector<32x32xf32>
    %cst_57 = arith.constant 0.000000e+00 : f32
    %96 = vector.broadcast %cst_57 : f32 to vector<32x32xf32>
    %97 = arith.select %28, %95, %96 : vector<32x32xi1>, vector<32x32xf32>
    %c30_i32 = arith.constant 30 : i32
    %98 = tpu.dynamic_rotate %92 by %c30_i32 dim 0 : vector<32x32xf32>, i32 -> vector<32x32xf32>
    %cst_58 = arith.constant 0.000000e+00 : f32
    %99 = vector.broadcast %cst_58 : f32 to vector<32x32xf32>
    %100 = arith.select %30, %98, %99 : vector<32x32xi1>, vector<32x32xf32>
    %101 = arith.truncf %97 : vector<32x32xf32> to vector<32x32xbf16>
    %c2 = arith.constant 2 : index
    %c0_59 = arith.constant 0 : index
    %c0_60 = arith.constant 0 : index
    %c0_61 = arith.constant 0 : index
    %102 = vector.load %arg4[%c2, %c0_59, %c0_60, %c0_61] : memref<6x2x32x32xbf16, #tpu.memory_space<vmem>>, vector<1x1x32x32xbf16>
    %103 = vector.shape_cast %102 : vector<1x1x32x32xbf16> to vector<32x32xbf16>
    %cst_62 = arith.constant dense<0.000000e+00> : vector<32x32xf32>
    %104 = tpu.matmul %101, %103, %cst_62 {dimension_numbers = #tpu.dot_dimension_numbers<[1], [0], [0], [1], [0, 0, 1, 1], [], []>} : vector<32x32xbf16>, vector<32x32xbf16>, vector<32x32xf32> -> vector<32x32xf32>
    %105 = arith.truncf %100 : vector<32x32xf32> to vector<32x32xbf16>
    %c2_63 = arith.constant 2 : index
    %c1_64 = arith.constant 1 : index
    %c0_65 = arith.constant 0 : index
    %c0_66 = arith.constant 0 : index
    %106 = vector.load %arg4[%c2_63, %c1_64, %c0_65, %c0_66] : memref<6x2x32x32xbf16, #tpu.memory_space<vmem>>, vector<1x1x32x32xbf16>
    %107 = vector.shape_cast %106 : vector<1x1x32x32xbf16> to vector<32x32xbf16>
    %cst_67 = arith.constant dense<0.000000e+00> : vector<32x32xf32>
    %108 = tpu.matmul %105, %107, %cst_67 {dimension_numbers = #tpu.dot_dimension_numbers<[1], [0], [0], [1], [0, 0, 1, 1], [], []>} : vector<32x32xbf16>, vector<32x32xbf16>, vector<32x32xf32> -> vector<32x32xf32>
    %109 = arith.addf %104, %108 : vector<32x32xf32>
    %c2_68 = arith.constant 2 : index
    %c0_69 = arith.constant 0 : index
    %c0_70 = arith.constant 0 : index
    %110 = vector.load %arg5[%c2_68, %c0_69, %c0_70] : memref<6x1x32xf32, #tpu.memory_space<vmem>>, vector<1x1x32xf32>
    %111 = vector.shape_cast %110 : vector<1x1x32xf32> to vector<1x32xf32>
    %112 = vector.broadcast %111 : vector<1x32xf32> to vector<32x32xf32>
    %113 = arith.addf %109, %112 : vector<32x32xf32>
    %cst_71 = arith.constant 0.000000e+00 : f32
    %114 = vector.broadcast %cst_71 : f32 to vector<32x32xf32>
    %115 = arith.maximumf %113, %114 : vector<32x32xf32>
    %116 = arith.truncf %115 : vector<32x32xf32> to vector<32x32xbf16>
    %c2_72 = arith.constant 2 : index
    %c0_73 = arith.constant 0 : index
    %c0_74 = arith.constant 0 : index
    %117 = vector.load %arg6[%c2_72, %c0_73, %c0_74] : memref<6x32x64xbf16, #tpu.memory_space<vmem>>, vector<1x32x64xbf16>
    %118 = vector.shape_cast %117 : vector<1x32x64xbf16> to vector<32x64xbf16>
    %cst_75 = arith.constant dense<0.000000e+00> : vector<32x64xf32>
    %119 = tpu.matmul %116, %118, %cst_75 {dimension_numbers = #tpu.dot_dimension_numbers<[1], [0], [0], [1], [0, 0, 1, 1], [], []>} : vector<32x32xbf16>, vector<32x64xbf16>, vector<32x64xf32> -> vector<32x64xf32>
    %c2_76 = arith.constant 2 : index
    %c0_77 = arith.constant 0 : index
    %c0_78 = arith.constant 0 : index
    %120 = vector.load %arg7[%c2_76, %c0_77, %c0_78] : memref<6x1x64xf32, #tpu.memory_space<vmem>>, vector<1x1x64xf32>
    %121 = vector.shape_cast %120 : vector<1x1x64xf32> to vector<1x64xf32>
    %122 = vector.broadcast %121 : vector<1x64xf32> to vector<32x64xf32>
    %123 = arith.addf %119, %122 : vector<32x64xf32>
    %124 = vector.extract_strided_slice %123 {offsets = [0, 0], sizes = [32, 32], strides = [1, 1]} : vector<32x64xf32> to vector<32x32xf32>
    %125 = arith.addf %92, %124 : vector<32x32xf32>
    %126 = vector.extract_strided_slice %123 {offsets = [0, 32], sizes = [32, 32], strides = [1, 1]} : vector<32x64xf32> to vector<32x32xf32>
    %127 = arith.addf %94, %126 : vector<32x32xf32>
    %c31_i32_79 = arith.constant 31 : i32
    %128 = tpu.dynamic_rotate %125 by %c31_i32_79 dim 0 : vector<32x32xf32>, i32 -> vector<32x32xf32>
    %cst_80 = arith.constant 0.000000e+00 : f32
    %129 = vector.broadcast %cst_80 : f32 to vector<32x32xf32>
    %130 = arith.select %24, %128, %129 : vector<32x32xi1>, vector<32x32xf32>
    %131 = arith.truncf %125 : vector<32x32xf32> to vector<32x32xbf16>
    %c3 = arith.constant 3 : index
    %c0_81 = arith.constant 0 : index
    %c0_82 = arith.constant 0 : index
    %c0_83 = arith.constant 0 : index
    %132 = vector.load %arg4[%c3, %c0_81, %c0_82, %c0_83] : memref<6x2x32x32xbf16, #tpu.memory_space<vmem>>, vector<1x1x32x32xbf16>
    %133 = vector.shape_cast %132 : vector<1x1x32x32xbf16> to vector<32x32xbf16>
    %cst_84 = arith.constant dense<0.000000e+00> : vector<32x32xf32>
    %134 = tpu.matmul %131, %133, %cst_84 {dimension_numbers = #tpu.dot_dimension_numbers<[1], [0], [0], [1], [0, 0, 1, 1], [], []>} : vector<32x32xbf16>, vector<32x32xbf16>, vector<32x32xf32> -> vector<32x32xf32>
    %135 = arith.truncf %130 : vector<32x32xf32> to vector<32x32xbf16>
    %c3_85 = arith.constant 3 : index
    %c1_86 = arith.constant 1 : index
    %c0_87 = arith.constant 0 : index
    %c0_88 = arith.constant 0 : index
    %136 = vector.load %arg4[%c3_85, %c1_86, %c0_87, %c0_88] : memref<6x2x32x32xbf16, #tpu.memory_space<vmem>>, vector<1x1x32x32xbf16>
    %137 = vector.shape_cast %136 : vector<1x1x32x32xbf16> to vector<32x32xbf16>
    %cst_89 = arith.constant dense<0.000000e+00> : vector<32x32xf32>
    %138 = tpu.matmul %135, %137, %cst_89 {dimension_numbers = #tpu.dot_dimension_numbers<[1], [0], [0], [1], [0, 0, 1, 1], [], []>} : vector<32x32xbf16>, vector<32x32xbf16>, vector<32x32xf32> -> vector<32x32xf32>
    %139 = arith.addf %134, %138 : vector<32x32xf32>
    %c3_90 = arith.constant 3 : index
    %c0_91 = arith.constant 0 : index
    %c0_92 = arith.constant 0 : index
    %140 = vector.load %arg5[%c3_90, %c0_91, %c0_92] : memref<6x1x32xf32, #tpu.memory_space<vmem>>, vector<1x1x32xf32>
    %141 = vector.shape_cast %140 : vector<1x1x32xf32> to vector<1x32xf32>
    %142 = vector.broadcast %141 : vector<1x32xf32> to vector<32x32xf32>
    %143 = arith.addf %139, %142 : vector<32x32xf32>
    %cst_93 = arith.constant 0.000000e+00 : f32
    %144 = vector.broadcast %cst_93 : f32 to vector<32x32xf32>
    %145 = arith.maximumf %143, %144 : vector<32x32xf32>
    %146 = arith.truncf %145 : vector<32x32xf32> to vector<32x32xbf16>
    %c3_94 = arith.constant 3 : index
    %c0_95 = arith.constant 0 : index
    %c0_96 = arith.constant 0 : index
    %147 = vector.load %arg6[%c3_94, %c0_95, %c0_96] : memref<6x32x64xbf16, #tpu.memory_space<vmem>>, vector<1x32x64xbf16>
    %148 = vector.shape_cast %147 : vector<1x32x64xbf16> to vector<32x64xbf16>
    %cst_97 = arith.constant dense<0.000000e+00> : vector<32x64xf32>
    %149 = tpu.matmul %146, %148, %cst_97 {dimension_numbers = #tpu.dot_dimension_numbers<[1], [0], [0], [1], [0, 0, 1, 1], [], []>} : vector<32x32xbf16>, vector<32x64xbf16>, vector<32x64xf32> -> vector<32x64xf32>
    %c3_98 = arith.constant 3 : index
    %c0_99 = arith.constant 0 : index
    %c0_100 = arith.constant 0 : index
    %150 = vector.load %arg7[%c3_98, %c0_99, %c0_100] : memref<6x1x64xf32, #tpu.memory_space<vmem>>, vector<1x1x64xf32>
    %151 = vector.shape_cast %150 : vector<1x1x64xf32> to vector<1x64xf32>
    %152 = vector.broadcast %151 : vector<1x64xf32> to vector<32x64xf32>
    %153 = arith.addf %149, %152 : vector<32x64xf32>
    %154 = vector.extract_strided_slice %153 {offsets = [0, 0], sizes = [32, 32], strides = [1, 1]} : vector<32x64xf32> to vector<32x32xf32>
    %155 = arith.addf %125, %154 : vector<32x32xf32>
    %156 = vector.extract_strided_slice %153 {offsets = [0, 32], sizes = [32, 32], strides = [1, 1]} : vector<32x64xf32> to vector<32x32xf32>
    %157 = arith.addf %127, %156 : vector<32x32xf32>
    %c1_i32_101 = arith.constant 1 : i32
    %158 = tpu.dynamic_rotate %155 by %c1_i32_101 dim 0 : vector<32x32xf32>, i32 -> vector<32x32xf32>
    %cst_102 = arith.constant 0.000000e+00 : f32
    %159 = vector.broadcast %cst_102 : f32 to vector<32x32xf32>
    %160 = arith.select %26, %158, %159 : vector<32x32xi1>, vector<32x32xf32>
    %c31_i32_103 = arith.constant 31 : i32
    %161 = tpu.dynamic_rotate %155 by %c31_i32_103 dim 0 : vector<32x32xf32>, i32 -> vector<32x32xf32>
    %cst_104 = arith.constant 0.000000e+00 : f32
    %162 = vector.broadcast %cst_104 : f32 to vector<32x32xf32>
    %163 = arith.select %24, %161, %162 : vector<32x32xi1>, vector<32x32xf32>
    %164 = arith.truncf %160 : vector<32x32xf32> to vector<32x32xbf16>
    %c4 = arith.constant 4 : index
    %c0_105 = arith.constant 0 : index
    %c0_106 = arith.constant 0 : index
    %c0_107 = arith.constant 0 : index
    %165 = vector.load %arg4[%c4, %c0_105, %c0_106, %c0_107] : memref<6x2x32x32xbf16, #tpu.memory_space<vmem>>, vector<1x1x32x32xbf16>
    %166 = vector.shape_cast %165 : vector<1x1x32x32xbf16> to vector<32x32xbf16>
    %cst_108 = arith.constant dense<0.000000e+00> : vector<32x32xf32>
    %167 = tpu.matmul %164, %166, %cst_108 {dimension_numbers = #tpu.dot_dimension_numbers<[1], [0], [0], [1], [0, 0, 1, 1], [], []>} : vector<32x32xbf16>, vector<32x32xbf16>, vector<32x32xf32> -> vector<32x32xf32>
    %168 = arith.truncf %163 : vector<32x32xf32> to vector<32x32xbf16>
    %c4_109 = arith.constant 4 : index
    %c1_110 = arith.constant 1 : index
    %c0_111 = arith.constant 0 : index
    %c0_112 = arith.constant 0 : index
    %169 = vector.load %arg4[%c4_109, %c1_110, %c0_111, %c0_112] : memref<6x2x32x32xbf16, #tpu.memory_space<vmem>>, vector<1x1x32x32xbf16>
    %170 = vector.shape_cast %169 : vector<1x1x32x32xbf16> to vector<32x32xbf16>
    %cst_113 = arith.constant dense<0.000000e+00> : vector<32x32xf32>
    %171 = tpu.matmul %168, %170, %cst_113 {dimension_numbers = #tpu.dot_dimension_numbers<[1], [0], [0], [1], [0, 0, 1, 1], [], []>} : vector<32x32xbf16>, vector<32x32xbf16>, vector<32x32xf32> -> vector<32x32xf32>
    %172 = arith.addf %167, %171 : vector<32x32xf32>
    %c4_114 = arith.constant 4 : index
    %c0_115 = arith.constant 0 : index
    %c0_116 = arith.constant 0 : index
    %173 = vector.load %arg5[%c4_114, %c0_115, %c0_116] : memref<6x1x32xf32, #tpu.memory_space<vmem>>, vector<1x1x32xf32>
    %174 = vector.shape_cast %173 : vector<1x1x32xf32> to vector<1x32xf32>
    %175 = vector.broadcast %174 : vector<1x32xf32> to vector<32x32xf32>
    %176 = arith.addf %172, %175 : vector<32x32xf32>
    %cst_117 = arith.constant 0.000000e+00 : f32
    %177 = vector.broadcast %cst_117 : f32 to vector<32x32xf32>
    %178 = arith.maximumf %176, %177 : vector<32x32xf32>
    %179 = arith.truncf %178 : vector<32x32xf32> to vector<32x32xbf16>
    %c4_118 = arith.constant 4 : index
    %c0_119 = arith.constant 0 : index
    %c0_120 = arith.constant 0 : index
    %180 = vector.load %arg6[%c4_118, %c0_119, %c0_120] : memref<6x32x64xbf16, #tpu.memory_space<vmem>>, vector<1x32x64xbf16>
    %181 = vector.shape_cast %180 : vector<1x32x64xbf16> to vector<32x64xbf16>
    %cst_121 = arith.constant dense<0.000000e+00> : vector<32x64xf32>
    %182 = tpu.matmul %179, %181, %cst_121 {dimension_numbers = #tpu.dot_dimension_numbers<[1], [0], [0], [1], [0, 0, 1, 1], [], []>} : vector<32x32xbf16>, vector<32x64xbf16>, vector<32x64xf32> -> vector<32x64xf32>
    %c4_122 = arith.constant 4 : index
    %c0_123 = arith.constant 0 : index
    %c0_124 = arith.constant 0 : index
    %183 = vector.load %arg7[%c4_122, %c0_123, %c0_124] : memref<6x1x64xf32, #tpu.memory_space<vmem>>, vector<1x1x64xf32>
    %184 = vector.shape_cast %183 : vector<1x1x64xf32> to vector<1x64xf32>
    %185 = vector.broadcast %184 : vector<1x64xf32> to vector<32x64xf32>
    %186 = arith.addf %182, %185 : vector<32x64xf32>
    %187 = vector.extract_strided_slice %186 {offsets = [0, 0], sizes = [32, 32], strides = [1, 1]} : vector<32x64xf32> to vector<32x32xf32>
    %188 = arith.addf %155, %187 : vector<32x32xf32>
    %189 = vector.extract_strided_slice %186 {offsets = [0, 32], sizes = [32, 32], strides = [1, 1]} : vector<32x64xf32> to vector<32x32xf32>
    %190 = arith.addf %157, %189 : vector<32x32xf32>
    %c2_i32_125 = arith.constant 2 : i32
    %191 = tpu.dynamic_rotate %188 by %c2_i32_125 dim 0 : vector<32x32xf32>, i32 -> vector<32x32xf32>
    %cst_126 = arith.constant 0.000000e+00 : f32
    %192 = vector.broadcast %cst_126 : f32 to vector<32x32xf32>
    %193 = arith.select %28, %191, %192 : vector<32x32xi1>, vector<32x32xf32>
    %c30_i32_127 = arith.constant 30 : i32
    %194 = tpu.dynamic_rotate %188 by %c30_i32_127 dim 0 : vector<32x32xf32>, i32 -> vector<32x32xf32>
    %cst_128 = arith.constant 0.000000e+00 : f32
    %195 = vector.broadcast %cst_128 : f32 to vector<32x32xf32>
    %196 = arith.select %30, %194, %195 : vector<32x32xi1>, vector<32x32xf32>
    %197 = arith.truncf %193 : vector<32x32xf32> to vector<32x32xbf16>
    %c5 = arith.constant 5 : index
    %c0_129 = arith.constant 0 : index
    %c0_130 = arith.constant 0 : index
    %c0_131 = arith.constant 0 : index
    %198 = vector.load %arg4[%c5, %c0_129, %c0_130, %c0_131] : memref<6x2x32x32xbf16, #tpu.memory_space<vmem>>, vector<1x1x32x32xbf16>
    %199 = vector.shape_cast %198 : vector<1x1x32x32xbf16> to vector<32x32xbf16>
    %cst_132 = arith.constant dense<0.000000e+00> : vector<32x32xf32>
    %200 = tpu.matmul %197, %199, %cst_132 {dimension_numbers = #tpu.dot_dimension_numbers<[1], [0], [0], [1], [0, 0, 1, 1], [], []>} : vector<32x32xbf16>, vector<32x32xbf16>, vector<32x32xf32> -> vector<32x32xf32>
    %201 = arith.truncf %196 : vector<32x32xf32> to vector<32x32xbf16>
    %c5_133 = arith.constant 5 : index
    %c1_134 = arith.constant 1 : index
    %c0_135 = arith.constant 0 : index
    %c0_136 = arith.constant 0 : index
    %202 = vector.load %arg4[%c5_133, %c1_134, %c0_135, %c0_136] : memref<6x2x32x32xbf16, #tpu.memory_space<vmem>>, vector<1x1x32x32xbf16>
    %203 = vector.shape_cast %202 : vector<1x1x32x32xbf16> to vector<32x32xbf16>
    %cst_137 = arith.constant dense<0.000000e+00> : vector<32x32xf32>
    %204 = tpu.matmul %201, %203, %cst_137 {dimension_numbers = #tpu.dot_dimension_numbers<[1], [0], [0], [1], [0, 0, 1, 1], [], []>} : vector<32x32xbf16>, vector<32x32xbf16>, vector<32x32xf32> -> vector<32x32xf32>
    %205 = arith.addf %200, %204 : vector<32x32xf32>
    %c5_138 = arith.constant 5 : index
    %c0_139 = arith.constant 0 : index
    %c0_140 = arith.constant 0 : index
    %206 = vector.load %arg5[%c5_138, %c0_139, %c0_140] : memref<6x1x32xf32, #tpu.memory_space<vmem>>, vector<1x1x32xf32>
    %207 = vector.shape_cast %206 : vector<1x1x32xf32> to vector<1x32xf32>
    %208 = vector.broadcast %207 : vector<1x32xf32> to vector<32x32xf32>
    %209 = arith.addf %205, %208 : vector<32x32xf32>
    %cst_141 = arith.constant 0.000000e+00 : f32
    %210 = vector.broadcast %cst_141 : f32 to vector<32x32xf32>
    %211 = arith.maximumf %209, %210 : vector<32x32xf32>
    %212 = arith.truncf %211 : vector<32x32xf32> to vector<32x32xbf16>
    %c5_142 = arith.constant 5 : index
    %c0_143 = arith.constant 0 : index
    %c0_144 = arith.constant 0 : index
    %213 = vector.load %arg6[%c5_142, %c0_143, %c0_144] : memref<6x32x64xbf16, #tpu.memory_space<vmem>>, vector<1x32x64xbf16>
    %214 = vector.shape_cast %213 : vector<1x32x64xbf16> to vector<32x64xbf16>
    %cst_145 = arith.constant dense<0.000000e+00> : vector<32x64xf32>
    %215 = tpu.matmul %212, %214, %cst_145 {dimension_numbers = #tpu.dot_dimension_numbers<[1], [0], [0], [1], [0, 0, 1, 1], [], []>} : vector<32x32xbf16>, vector<32x64xbf16>, vector<32x64xf32> -> vector<32x64xf32>
    %c5_146 = arith.constant 5 : index
    %c0_147 = arith.constant 0 : index
    %c0_148 = arith.constant 0 : index
    %216 = vector.load %arg7[%c5_146, %c0_147, %c0_148] : memref<6x1x64xf32, #tpu.memory_space<vmem>>, vector<1x1x64xf32>
    %217 = vector.shape_cast %216 : vector<1x1x64xf32> to vector<1x64xf32>
    %218 = vector.broadcast %217 : vector<1x64xf32> to vector<32x64xf32>
    %219 = arith.addf %215, %218 : vector<32x64xf32>
    %220 = vector.extract_strided_slice %219 {offsets = [0, 32], sizes = [32, 32], strides = [1, 1]} : vector<32x64xf32> to vector<32x32xf32>
    %221 = arith.addf %190, %220 : vector<32x32xf32>
    %cst_149 = arith.constant 0.000000e+00 : f32
    %222 = vector.broadcast %cst_149 : f32 to vector<32x32xf32>
    %223 = arith.maximumf %221, %222 : vector<32x32xf32>
    %224 = arith.truncf %223 : vector<32x32xf32> to vector<32x32xbf16>
    %c0_150 = arith.constant 0 : index
    %c0_151 = arith.constant 0 : index
    %225 = vector.load %arg8[%c0_150, %c0_151] : memref<32x32xbf16, #tpu.memory_space<vmem>>, vector<32x32xbf16>
    %cst_152 = arith.constant dense<0.000000e+00> : vector<32x32xf32>
    %226 = tpu.matmul %224, %225, %cst_152 {dimension_numbers = #tpu.dot_dimension_numbers<[1], [0], [0], [1], [0, 0, 1, 1], [], []>} : vector<32x32xbf16>, vector<32x32xbf16>, vector<32x32xf32> -> vector<32x32xf32>
    %c0_153 = arith.constant 0 : index
    %c0_154 = arith.constant 0 : index
    %227 = vector.load %arg9[%c0_153, %c0_154] : memref<1x32xf32, #tpu.memory_space<vmem>>, vector<1x32xf32>
    %228 = vector.broadcast %227 : vector<1x32xf32> to vector<32x32xf32>
    %229 = arith.addf %226, %228 : vector<32x32xf32>
    %cst_155 = arith.constant 0.000000e+00 : f32
    %230 = vector.broadcast %cst_155 : f32 to vector<32x32xf32>
    %231 = arith.maximumf %229, %230 : vector<32x32xf32>
    %232 = vector.shape_cast %231 : vector<32x32xf32> to vector<2x16x32xf32>
    %cst_156 = arith.constant dense<0.000000e+00> : vector<2x32xf32>
    %233 = vector.multi_reduction <add>, %232, %cst_156 [1] : vector<2x16x32xf32> to vector<2x32xf32>
    %cst_157 = arith.constant 1.600000e+01 : f32
    %234 = vector.broadcast %cst_157 : f32 to vector<2x32xf32>
    %235 = arith.divf %233, %234 : vector<2x32xf32>
    %c0_158 = arith.constant 0 : index
    %c0_159 = arith.constant 0 : index
    %236 = vector.load %arg10[%c0_158, %c0_159] : memref<32x1xf32, #tpu.memory_space<vmem>>, vector<32x1xf32>
    %cst_160 = arith.constant dense<0.000000e+00> : vector<2x1xf32>
    %237 = tpu.matmul %235, %236, %cst_160 {dimension_numbers = #tpu.dot_dimension_numbers<[1], [0], [0], [1], [0, 0, 1, 1], [], []>} : vector<2x32xf32>, vector<32x1xf32>, vector<2x1xf32> -> vector<2x1xf32>
    %c0_161 = arith.constant 0 : index
    %c0_162 = arith.constant 0 : index
    %238 = vector.load %arg11[%c0_161, %c0_162] : memref<1x1xf32, #tpu.memory_space<vmem>>, vector<1x1xf32>
    %239 = vector.broadcast %238 : vector<1x1xf32> to vector<2x1xf32>
    %240 = arith.addf %237, %239 : vector<2x1xf32>
    %c0_163 = arith.constant 0 : index
    %c0_164 = arith.constant 0 : index
    %241 = vector.load %arg12[%c0_163, %c0_164] : memref<2x1xf32, #tpu.memory_space<vmem>>, vector<2x1xf32>
    tpu.vector_store %arg12[%c0_163, %c0_164], %240 {strides = array<i32>} : memref<2x1xf32, #tpu.memory_space<vmem>>, vector<2x1xf32>,
    return
  }
  func.func @transform_0(%arg0: i32) -> (i32, i32) {
    %c0_i32 = arith.constant 0 : i32
    %c0_i32_0 = arith.constant 0 : i32
    return %arg0, %c0_i32 : i32, i32
  }
  func.func @transform_1(%arg0: i32) -> (i32, i32) {
    %c0_i32 = arith.constant 0 : i32
    %c0_i32_0 = arith.constant 0 : i32
    %c0_i32_1 = arith.constant 0 : i32
    return %c0_i32, %c0_i32_0 : i32, i32
  }
  func.func @transform_2(%arg0: i32) -> (i32, i32) {
    %c0_i32 = arith.constant 0 : i32
    %c0_i32_0 = arith.constant 0 : i32
    %c0_i32_1 = arith.constant 0 : i32
    return %c0_i32, %c0_i32_0 : i32, i32
  }
  func.func @transform_3(%arg0: i32) -> (i32, i32, i32, i32) {
    %c0_i32 = arith.constant 0 : i32
    %c0_i32_0 = arith.constant 0 : i32
    %c0_i32_1 = arith.constant 0 : i32
    %c0_i32_2 = arith.constant 0 : i32
    %c0_i32_3 = arith.constant 0 : i32
    return %c0_i32, %c0_i32_0, %c0_i32_1, %c0_i32_2 : i32, i32, i32, i32
  }
  func.func @transform_4(%arg0: i32) -> (i32, i32, i32) {
    %c0_i32 = arith.constant 0 : i32
    %c0_i32_0 = arith.constant 0 : i32
    %c0_i32_1 = arith.constant 0 : i32
    %c0_i32_2 = arith.constant 0 : i32
    return %c0_i32, %c0_i32_0, %c0_i32_1 : i32, i32, i32
  }
  func.func @transform_5(%arg0: i32) -> (i32, i32, i32) {
    %c0_i32 = arith.constant 0 : i32
    %c0_i32_0 = arith.constant 0 : i32
    %c0_i32_1 = arith.constant 0 : i32
    %c0_i32_2 = arith.constant 0 : i32
    return %c0_i32, %c0_i32_0, %c0_i32_1 : i32, i32, i32
  }
  func.func @transform_6(%arg0: i32) -> (i32, i32, i32) {
    %c0_i32 = arith.constant 0 : i32
    %c0_i32_0 = arith.constant 0 : i32
    %c0_i32_1 = arith.constant 0 : i32
    %c0_i32_2 = arith.constant 0 : i32
    return %c0_i32, %c0_i32_0, %c0_i32_1 : i32, i32, i32
  }
  func.func @transform_7(%arg0: i32) -> (i32, i32) {
    %c0_i32 = arith.constant 0 : i32
    %c0_i32_0 = arith.constant 0 : i32
    %c0_i32_1 = arith.constant 0 : i32
    return %c0_i32, %c0_i32_0 : i32, i32
  }
  func.func @transform_8(%arg0: i32) -> (i32, i32) {
    %c0_i32 = arith.constant 0 : i32
    %c0_i32_0 = arith.constant 0 : i32
    %c0_i32_1 = arith.constant 0 : i32
    return %c0_i32, %c0_i32_0 : i32, i32
  }
  func.func @transform_9(%arg0: i32) -> (i32, i32) {
    %c0_i32 = arith.constant 0 : i32
    %c0_i32_0 = arith.constant 0 : i32
    %c0_i32_1 = arith.constant 0 : i32
    return %c0_i32, %c0_i32_0 : i32, i32
  }
  func.func @transform_10(%arg0: i32) -> (i32, i32) {
    %c0_i32 = arith.constant 0 : i32
    %c0_i32_0 = arith.constant 0 : i32
    %c0_i32_1 = arith.constant 0 : i32
    return %c0_i32, %c0_i32_0 : i32, i32
  }
  func.func @transform_11(%arg0: i32) -> (i32, i32) {
    %c0_i32 = arith.constant 0 : i32
    %c0_i32_0 = arith.constant 0 : i32
    return %arg0, %c0_i32 : i32, i32
  }
}

</mosaic_0001>

<llo_original>
// kernel: tpu_custom_call.1
$region0: #{tpu_custom_call.1}
  #allocation0 [shape = 'u32[]', space=smem, size = 0x4, offset = 0x4, fixed_abs, tag = 'smem constant byte address 0x4 - core index']
  #allocation1 [shape = 'u32[72,128]{1,0:T(1,128)}', space=vmem, size = 0x9000, scoped, tag = 'internal scratch']
  #allocation2 [shape = 'f32[1,1]{1,0:T(1,128)S(1)}', space=vmem, size = 0x200, scoped, tag = 'scoped memory for tpu_custom_call.1']
  %s0 = inlined_call_operand.vmem [shape: bf16[32,4], index: 0, kind: input, shape index: {}]
  %s1 = inlined_call_operand.vmem [shape: bf16[4,32], index: 1, kind: input, shape index: {}]
  %s2 = inlined_call_operand.vmem [shape: f32[1,32], index: 2, kind: input, shape index: {}]
  %s3 = inlined_call_operand.hbm [shape: bf16[6,2,32,32], index: 3, kind: input, shape index: {}]
  %s4 = inlined_call_operand.vmem [shape: f32[6,1,32], index: 4, kind: input, shape index: {}]
  %s5 = inlined_call_operand.hbm [shape: bf16[6,32,64], index: 5, kind: input, shape index: {}]
  %s6 = inlined_call_operand.vmem [shape: f32[6,1,64], index: 6, kind: input, shape index: {}]
  %s7 = inlined_call_operand.vmem [shape: bf16[32,32], index: 7, kind: input, shape index: {}]
  %s8 = inlined_call_operand.vmem [shape: f32[1,32], index: 8, kind: input, shape index: {}]
  %s9 = inlined_call_operand.vmem [shape: f32[32,1], index: 9, kind: input, shape index: {}]
  %s10 = inlined_call_operand.<no memory space> [shape: f32[1,1], index: 10, kind: input, shape index: {}]
  %s11 = inlined_call_operand.vmem [shape: f32[2,1], index: 11, kind: output, shape index: {}]
  %s12 = sld [smem:[#allocation0]]
  $region62: #{tpu_custom_call.1} parent=0
    _
  %s14 = ssub.s32 1, %s12
  %s15 = scalar_select 0, %s14, %s12
  %v16 = vstv %s10
  %17 = vst [vmem:[#allocation2] sm:$0x1] %v16
  $region1: #{tpu_custom_call.1} parent=0
    #allocation3 [shape = 'u8[98304]{0}', space=vmem, size = 0x18000, scoped, tag = 'input window, operand 3, single buffered']
    #allocation4 [shape = 's32[1]{0}', space=sflag, size = 0x4, scoped, tag = 'scoped memory for tpu_custom_call.1']
    #allocation5 [shape = 'u8[49152]{0}', space=vmem, size = 0xc000, scoped, tag = 'input window, operand 5, single buffered']
    #allocation6 [shape = 's32[1]{0}', space=sflag, size = 0x4, scoped, tag = 'scoped memory for tpu_custom_call.1']
    %18 = vsyncpa [#allocation4], 0
    %19 = vsyncpa [#allocation6], 0
    // Predicated region
    $region2: #{tpu_custom_call.1} parent=1 // pred_check
      _
    $region3: #{tpu_custom_call.1} parent=1 // pred_check_branch
      %21 = sbr.rel (0) target = $region5
    $region4: #{tpu_custom_call.1} parent=1 // pred_region
      _
    $region5: #{tpu_custom_call.1} parent=1 // pred_fallthru
      _
    // Predicated region
    $region6: #{tpu_custom_call.1} parent=1 // pred_check
      _
    $region7: #{tpu_custom_call.1} parent=1 // pred_check_branch
      %23 = sbr.rel (0) target = $region9
    $region8: #{tpu_custom_call.1} parent=1 // pred_region
      _
    $region9: #{tpu_custom_call.1} parent=1 // pred_fallthru
      _
    // Predicated region
    $region10: #{tpu_custom_call.1} parent=1 // pred_check
      _
    $region11: #{tpu_custom_call.1} parent=1 // pred_check_branch
      %25 = sbr.rel (0) target = $region13
    $region12: #{tpu_custom_call.1} parent=1 // pred_region
      _
    $region13: #{tpu_custom_call.1} parent=1 // pred_fallthru
      _
    // Predicated region
    $region14: #{tpu_custom_call.1} parent=1 // pred_check
      _
    $region15: #{tpu_custom_call.1} parent=1 // pred_check_branch
      %27 = sbr.rel (0) target = $region17
    $region16: #{tpu_custom_call.1} parent=1 // pred_region
      %29 = vsyncadd [#allocation4], 0
      %s30 = sshll.u32 %s3, 4
      %s31 = int_to_ptr.hbm [resolvable:$true] %s30
      %s32 = sshll.u32 [#allocation3], 4
      %s33 = int_to_ptr.vmem [resolvable:$true] %s32
      %38 = dma.hbm_to_vmem [thread:$0]  %s31, 3072, %s33, [#allocation4], 64, 64, 4
    $region17: #{tpu_custom_call.1} parent=1 // pred_fallthru
      _
    // Predicated region
    $region18: #{tpu_custom_call.1} parent=1 // pred_check
      _
    $region19: #{tpu_custom_call.1} parent=1 // pred_check_branch
      %40 = sbr.rel (0) target = $region21
    $region20: #{tpu_custom_call.1} parent=1 // pred_region
      _
    $region21: #{tpu_custom_call.1} parent=1 // pred_fallthru
      _
    // Predicated region
    $region22: #{tpu_custom_call.1} parent=1 // pred_check
      _
    $region23: #{tpu_custom_call.1} parent=1 // pred_check_branch
      %42 = sbr.rel (0) target = $region25
    $region24: #{tpu_custom_call.1} parent=1 // pred_region
      %44 = vsyncadd [#allocation6], 0
      %s45 = sshll.u32 %s5, 4
      %s46 = int_to_ptr.hbm [resolvable:$true] %s45
      %s47 = sshll.u32 [#allocation5], 4
      %s48 = int_to_ptr.vmem [resolvable:$true] %s47
      %53 = dma.hbm_to_vmem [thread:$0]  %s46, 1536, %s48, [#allocation6], 64, 64, 4
    $region25: #{tpu_custom_call.1} parent=1 // pred_fallthru
      _
    // Predicated region
    $region26: #{tpu_custom_call.1} parent=1 // pred_check
      _
    $region27: #{tpu_custom_call.1} parent=1 // pred_check_branch
      %55 = sbr.rel (0) target = $region29
    $region28: #{tpu_custom_call.1} parent=1 // pred_region
      _
    $region29: #{tpu_custom_call.1} parent=1 // pred_fallthru
      _
    // Predicated region
    $region30: #{tpu_custom_call.1} parent=1 // pred_check
      _
    $region31: #{tpu_custom_call.1} parent=1 // pred_check_branch
      %57 = sbr.rel (0) target = $region33
    $region32: #{tpu_custom_call.1} parent=1 // pred_region
      _
    $region33: #{tpu_custom_call.1} parent=1 // pred_fallthru
      _
    // Predicated region
    $region34: #{tpu_custom_call.1} parent=1 // pred_check
      _
    $region35: #{tpu_custom_call.1} parent=1 // pred_check_branch
      %59 = sbr.rel (0) target = $region37
    $region36: #{tpu_custom_call.1} parent=1 // pred_region
      _
    $region37: #{tpu_custom_call.1} parent=1 // pred_fallthru
      _
    // Predicated region
    $region38: #{tpu_custom_call.1} parent=1 // pred_check
      _
    $region39: #{tpu_custom_call.1} parent=1 // pred_check_branch
      %61 = sbr.rel (0) target = $region41
    $region40: #{tpu_custom_call.1} parent=1 // pred_region
      _
    $region41: #{tpu_custom_call.1} parent=1 // pred_fallthru
      _
    // Predicated region
    $region42: #{tpu_custom_call.1} parent=1 // pred_check
      _
    $region43: #{tpu_custom_call.1} parent=1 // pred_check_branch
      %63 = sbr.rel (0) target = $region45
    $region44: #{tpu_custom_call.1} parent=1 // pred_region
      _
    $region45: #{tpu_custom_call.1} parent=1 // pred_fallthru
      _
    // Predicated region
    $region46: #{tpu_custom_call.1} parent=1 // pred_check
      _
    $region47: #{tpu_custom_call.1} parent=1 // pred_check_branch
      %65 = sbr.rel (0) target = $region49
    $region48: #{tpu_custom_call.1} parent=1 // pred_region
      %67 = dma.done [#allocation4], 3072
    $region49: #{tpu_custom_call.1} parent=1 // pred_fallthru
      _
    // Predicated region
    $region50: #{tpu_custom_call.1} parent=1 // pred_check
      _
    $region51: #{tpu_custom_call.1} parent=1 // pred_check_branch
      %69 = sbr.rel (0) target = $region53
    $region52: #{tpu_custom_call.1} parent=1 // pred_region
      %71 = dma.done [#allocation6], 1536
    $region53: #{tpu_custom_call.1} parent=1 // pred_fallthru
      _
    %v73 = vld [vmem:[%s0] sm:$0xf]
    %v74 = vld [vmem:[%s0 + $0x4] sm:$0xf]
    %v75 = vld [vmem:[%s0 + $0x8] sm:$0xf]
    %v76 = vld [vmem:[%s0 + $0xc] sm:$0xf]
    %v77 = vld [vmem:[%s1] sm:$0x3]
    %v78 = vld [vmem:[%s2] sm:$0x1]
    %v80 = vperm.slane %v78, 0
    %v86 = vunpack.c.l.b16 %v73
    %v87 = vunpack.c.l.b16 %v74
    %v88 = vunpack.c.l.b16 %v75
    %v89 = vunpack.c.l.b16 %v76
    %v90 = vpack.c.b16 %v87, %v86
    %v91 = vpack.c.b16 %v89, %v88
    %vm92 = vcmask 31744
    %v94 = vsel %vm92, %v90, 0
    %v97 = vsel %vm92, %v91, 0
    %vm99 = vcmask 1041408
    %v101 = vsel %vm99, %v77, 0
    %103 = vmatpush.bf16.msra.mxu0 0
    %104 = vmatpush.bf16.msra.mxu0 0
    %105 = vmatpush.bf16.msra.mxu0 0
    %106 = vmatpush.bf16.msra.mxu0 0
    %107 = vmatpush.bf16.msra.mxu0 0
    %108 = vmatpush.bf16.msra.mxu0 0
    %109 = vmatpush.bf16.msra.mxu0 0
    %110 = vmatpush.bf16.msra.mxu0 %v101
    %111 = vmatmul.bf16.gmra.mxu0 %v94
    %v112 = vpop.f32.mrf.mxu0
    %v113 = vadd.f32 %v80, %v112
    %v114 = vpop.f32.mrf.mxu0
    %v115 = vadd.f32 %v80, %v114
    %116 = vmatmul.bf16.gmra.mxu0 %v97
    %v117 = vpop.f32.mrf.mxu0
    %v118 = vadd.f32 %v80, %v117
    %v119 = vpop.f32.mrf.mxu0
    %v120 = vadd.f32 %v80, %v119
    %121 = vdwg.mxu0
    %v122 = vlaneseq
    %v123 = vshrl.u32 %v122, 7
    %v124 = vadd.s32 %v123, 8
    %v125 = vadd.s32 %v123, 16
    %v126 = vadd.s32 %v123, 24
    %vm127 = vcmp.lt.s32.totalorder %v123, 0
    %v128 = vsub.s32 0, %v123
    %v129 = vsel %vm127, %v128, %v123
    %v130 = vshrl.u32 %v129, 4
    %v131 = vand.u32 %v129, 15
    %v132 = vsub.s32 0, %v131
    %v133 = vsel %vm127, %v132, %v131
    %vm134 = vcmp.lt.s32.totalorder %v124, 0
    %v135 = vsub.s32 0, %v124
    %v136 = vsel %vm134, %v135, %v124
    %v137 = vshrl.u32 %v136, 4
    %v138 = vand.u32 %v136, 15
    %v139 = vsub.s32 0, %v138
    %v140 = vsel %vm134, %v139, %v138
    %vm141 = vcmp.lt.s32.totalorder %v125, 0
    %v142 = vsub.s32 0, %v125
    %v143 = vsel %vm141, %v142, %v125
    %v144 = vshrl.u32 %v143, 4
    %v145 = vand.u32 %v143, 15
    %v146 = vsub.s32 0, %v145
    %v147 = vsel %vm141, %v146, %v145
    %vm148 = vcmp.lt.s32.totalorder %v126, 0
    %v149 = vsub.s32 0, %v126
    %v150 = vsel %vm148, %v149, %v126
    %v151 = vshrl.u32 %v150, 4
    %v152 = vand.u32 %v150, 15
    %v153 = vsub.s32 0, %v152
    %v154 = vsel %vm148, %v153, %v152
    %vm155 = vcmp.ne.s32.totalorder %v133, 0
    %vm156 = vcmp.ne.s32.totalorder %v140, 0
    %vm157 = vcmp.ne.s32.totalorder %v147, 0
    %vm158 = vcmp.ne.s32.totalorder %v154, 0
    %vm159 = vcmp.lt.s32.totalorder %v133, 0
    %vm160 = vcmp.lt.s32.totalorder %v140, 0
    %vm161 = vcmp.lt.s32.totalorder %v147, 0
    %vm162 = vcmp.lt.s32.totalorder %v154, 0
    %vm163 = vmand %vm159, %vm155
    %vm164 = vmand %vm160, %vm156
    %vm165 = vmand %vm161, %vm157
    %vm166 = vmand %vm162, %vm158
    %v167 = vadd.s32 %v133, 16
    %v168 = vadd.s32 %v140, 16
    %v169 = vadd.s32 %v147, 16
    %v170 = vadd.s32 %v154, 16
    %v171 = vsel %vm163, %v167, %v133
    %v172 = vsel %vm164, %v168, %v140
    %v173 = vsel %vm165, %v169, %v147
    %v174 = vsel %vm166, %v170, %v154
    %vm175 = vcmp.lt.s32.totalorder %v171, 15
    %vm176 = vcmp.lt.s32.totalorder %v172, 15
    %vm177 = vcmp.lt.s32.totalorder %v173, 15
    %vm178 = vcmp.lt.s32.totalorder %v174, 15
    %vm179 = vcmp.ge.s32.totalorder %v171, 1
    %vm180 = vcmp.ge.s32.totalorder %v172, 1
    %vm181 = vcmp.ge.s32.totalorder %v173, 1
    %vm182 = vcmp.ge.s32.totalorder %v174, 1
    %vm183 = vcmp.ge.s32.totalorder %v171, 2
    %vm184 = vcmp.ge.s32.totalorder %v172, 2
    %vm185 = vcmp.ge.s32.totalorder %v173, 2
    %vm186 = vcmp.ge.s32.totalorder %v174, 2
    %vm187 = vcmp.lt.s32.totalorder %v171, 14
    %vm188 = vcmp.lt.s32.totalorder %v172, 14
    %vm189 = vcmp.lt.s32.totalorder %v173, 14
    %vm190 = vcmp.lt.s32.totalorder %v174, 14
    %v191 = vrot.slane %v113, 1
    %v192 = vrot.slane %v115, 1
    %v193 = vrot.slane %v118, 1
    %v194 = vrot.slane %v120, 1
    %vm195 = vcmp.lt.s32.totalorder %v123, 7
    %v196 = vsel %vm195, %v193, %v194
    %v197 = vsel %vm195, %v192, %v193
    %v198 = vsel %vm195, %v191, %v192
    %v199 = vsel %vm195, %v194, %v191
    %v200 = vsel %vm175, %v198, 0.0
    %v201 = vsel %vm176, %v197, 0.0
    %v202 = vsel %vm177, %v196, 0.0
    %v203 = vsel %vm178, %v199, 0.0
    %v204 = vpack.c.bf16 %v115, %v113
    %v205 = vpack.c.bf16 %v120, %v118
    %v206 = vld [vmem:[#allocation3] sm:$0xf]
    %v207 = vld [vmem:[#allocation3 + $0x4] sm:$0xf]
    %v208 = vld [vmem:[#allocation3 + $0x8] sm:$0xf]
    %v209 = vld [vmem:[#allocation3 + $0xc] sm:$0xf]
    %v210 = vpack.c.bf16 %v201, %v200
    %v211 = vpack.c.bf16 %v203, %v202
    %s212 = scalar_lea.vmem [#allocation3], 16
    %v213 = vld [vmem:[%s212] sm:$0xf]
    %v214 = vld [vmem:[%s212 + $0x4] sm:$0xf]
    %v215 = vld [vmem:[%s212 + $0x8] sm:$0xf]
    %v216 = vld [vmem:[%s212 + $0xc] sm:$0xf]
    %v221 = vunpack.c.l.b16 %v213
    %v222 = vunpack.c.l.b16 %v214
    %v223 = vunpack.c.l.b16 %v215
    %v224 = vunpack.c.l.b16 %v216
    %v225 = vpack.c.b16 %v222, %v221
    %v226 = vpack.c.b16 %v224, %v223
    %vm229 = vcmask 261120
    %v231 = vsel %vm229, %v210, 0
    %v234 = vsel %vm229, %v211, 0
    %236 = vmatpush.bf16.msra.mxu0 0
    %237 = vmatpush.bf16.msra.mxu0 0
    %238 = vmatpush.bf16.msra.mxu0 0
    %239 = vmatpush.bf16.msra.mxu0 0
    %240 = vmatpush.bf16.msra.mxu0 0
    %241 = vmatpush.bf16.msra.mxu0 0
    %242 = vmatpush.bf16.msra.mxu0 %v226
    %243 = vmatpush.bf16.msra.mxu0 %v225
    %244 = vmatmul.bf16.gmra.mxu0 %v231
    %v245 = vpop.f32.mrf.mxu0
    %v246 = vadd.f32 0.0, %v245
    %v247 = vpop.f32.mrf.mxu0
    %v248 = vadd.f32 0.0, %v247
    %249 = vmatmul.bf16.gmra.mxu0 %v234
    %v250 = vpop.f32.mrf.mxu0
    %v251 = vadd.f32 0.0, %v250
    %v252 = vpop.f32.mrf.mxu0
    %v253 = vadd.f32 0.0, %v252
    %254 = vdwg.mxu0
    %v259 = vunpack.c.l.b16 %v206
    %v260 = vunpack.c.l.b16 %v207
    %v261 = vunpack.c.l.b16 %v208
    %v262 = vunpack.c.l.b16 %v209
    %v263 = vpack.c.b16 %v260, %v259
    %v264 = vpack.c.b16 %v262, %v261
    %v268 = vsel %vm229, %v204, 0
    %v271 = vsel %vm229, %v205, 0
    %273 = vmatpush.bf16.msra.mxu0 0
    %274 = vmatpush.bf16.msra.mxu0 0
    %275 = vmatpush.bf16.msra.mxu0 0
    %276 = vmatpush.bf16.msra.mxu0 0
    %277 = vmatpush.bf16.msra.mxu0 0
    %278 = vmatpush.bf16.msra.mxu0 0
    %279 = vmatpush.bf16.msra.mxu0 %v264
    %280 = vmatpush.bf16.msra.mxu0 %v263
    %281 = vmatmul.bf16.gmra.mxu0 %v268
    %v282 = vpop.f32.mrf.mxu0
    %v283 = vadd.f32 %v246, %v282
    %v284 = vpop.f32.mrf.mxu0
    %v285 = vadd.f32 %v248, %v284
    %286 = vmatmul.bf16.gmra.mxu0 %v271
    %v287 = vpop.f32.mrf.mxu0
    %v288 = vadd.f32 %v251, %v287
    %v289 = vpop.f32.mrf.mxu0
    %v290 = vadd.f32 %v253, %v289
    %291 = vdwg.mxu0
    %v292 = vld [vmem:[%s4] sm:$0x1]
    %v294 = vperm.slane %v292, 0
    %v296 = vadd.f32 %v283, %v294
    %v297 = vadd.f32 %v285, %v294
    %v298 = vadd.f32 %v288, %v294
    %v299 = vadd.f32 %v290, %v294
    %v300 = vmax.f32 %v296, 0.0
    %v301 = vmax.f32 %v297, 0.0
    %v302 = vmax.f32 %v298, 0.0
    %v303 = vmax.f32 %v299, 0.0
    %v304 = vpack.c.bf16 %v301, %v300
    %v305 = vpack.c.bf16 %v303, %v302
    %v306 = vld [vmem:[#allocation5] sm:$0xf]
    %v307 = vld [vmem:[#allocation5 + $0x4] sm:$0xf]
    %v308 = vld [vmem:[#allocation5 + $0x8] sm:$0xf]
    %v309 = vld [vmem:[#allocation5 + $0xc] sm:$0xf]
    %v310 = vld [vmem:[%s6] sm:$0x1]
    %v312 = vperm.slane %v310, 0
    %v318 = vunpack.c.l.b16 %v306
    %v319 = vunpack.c.l.b16 %v307
    %v320 = vunpack.c.l.b16 %v308
    %v321 = vunpack.c.l.b16 %v309
    %v322 = vpack.c.b16 %v319, %v318
    %v323 = vpack.c.b16 %v321, %v320
    %v327 = vsel %vm229, %v304, 0
    %v330 = vsel %vm229, %v305, 0
    %332 = vmatpush.bf16.msra.mxu0 0
    %333 = vmatpush.bf16.msra.mxu0 0
    %334 = vmatpush.bf16.msra.mxu0 0
    %335 = vmatpush.bf16.msra.mxu0 0
    %336 = vmatpush.bf16.msra.mxu0 0
    %337 = vmatpush.bf16.msra.mxu0 0
    %338 = vmatpush.bf16.msra.mxu0 %v323
    %339 = vmatpush.bf16.msra.mxu0 %v322
    %340 = vmatmul.bf16.gmra.mxu0 %v327
    %v341 = vpop.f32.mrf.mxu0
    %v342 = vadd.f32 %v312, %v341
    %v343 = vpop.f32.mrf.mxu0
    %v344 = vadd.f32 %v312, %v343
    %345 = vmatmul.bf16.gmra.mxu0 %v330
    %v346 = vpop.f32.mrf.mxu0
    %v347 = vadd.f32 %v312, %v346
    %v348 = vpop.f32.mrf.mxu0
    %v349 = vadd.f32 %v312, %v348
    %350 = vdwg.mxu0
    %v351 = vadd.f32 %v113, %v342
    %v352 = vadd.f32 %v115, %v344
    %v353 = vadd.f32 %v118, %v347
    %v354 = vadd.f32 %v120, %v349
    %v355 = vadd.f32 %v342, 0.0
    %v356 = vadd.f32 %v344, 0.0
    %v357 = vadd.f32 %v347, 0.0
    %v358 = vadd.f32 %v349, 0.0
    %v359 = vrot.slane %v351, 7
    %v360 = vrot.slane %v352, 7
    %v361 = vrot.slane %v353, 7
    %v362 = vrot.slane %v354, 7
    %vm363 = vcmp.lt.s32.totalorder %v123, 1
    %v364 = vsel %vm363, %v361, %v362
    %v365 = vsel %vm363, %v360, %v361
    %v366 = vsel %vm363, %v359, %v360
    %v367 = vsel %vm363, %v362, %v359
    %v368 = vsel %vm179, %v367, 0.0
    %v369 = vsel %vm180, %v366, 0.0
    %v370 = vsel %vm181, %v365, 0.0
    %v371 = vsel %vm182, %v364, 0.0
    %v372 = vrot.slane %v351, 1
    %v373 = vrot.slane %v352, 1
    %v374 = vrot.slane %v353, 1
    %v375 = vrot.slane %v354, 1
    %v376 = vsel %vm195, %v374, %v375
    %v377 = vsel %vm195, %v373, %v374
    %v378 = vsel %vm195, %v372, %v373
    %v379 = vsel %vm195, %v375, %v372
    %v380 = vsel %vm175, %v378, 0.0
    %v381 = vsel %vm176, %v377, 0.0
    %v382 = vsel %vm177, %v376, 0.0
    %v383 = vsel %vm178, %v379, 0.0
    %v384 = vpack.c.bf16 %v369, %v368
    %v385 = vpack.c.bf16 %v371, %v370
    %s386 = scalar_lea.vmem [#allocation3], 32
    %v387 = vld [vmem:[%s386] sm:$0xf]
    %v388 = vld [vmem:[%s386 + $0x4] sm:$0xf]
    %v389 = vld [vmem:[%s386 + $0x8] sm:$0xf]
    %v390 = vld [vmem:[%s386 + $0xc] sm:$0xf]
    %v391 = vpack.c.bf16 %v381, %v380
    %v392 = vpack.c.bf16 %v383, %v382
    %s393 = scalar_lea.vmem [#allocation3], 48
    %v394 = vld [vmem:[%s393] sm:$0xf]
    %v395 = vld [vmem:[%s393 + $0x4] sm:$0xf]
    %v396 = vld [vmem:[%s393 + $0x8] sm:$0xf]
    %v397 = vld [vmem:[%s393 + $0xc] sm:$0xf]
    %v402 = vunpack.c.l.b16 %v394
    %v403 = vunpack.c.l.b16 %v395
    %v404 = vunpack.c.l.b16 %v396
    %v405 = vunpack.c.l.b16 %v397
    %v406 = vpack.c.b16 %v403, %v402
    %v407 = vpack.c.b16 %v405, %v404
    %v411 = vsel %vm229, %v391, 0
    %v414 = vsel %vm229, %v392, 0
    %416 = vmatpush.bf16.msra.mxu0 0
    %417 = vmatpush.bf16.msra.mxu0 0
    %418 = vmatpush.bf16.msra.mxu0 0
    %419 = vmatpush.bf16.msra.mxu0 0
    %420 = vmatpush.bf16.msra.mxu0 0
    %421 = vmatpush.bf16.msra.mxu0 0
    %422 = vmatpush.bf16.msra.mxu0 %v407
    %423 = vmatpush.bf16.msra.mxu0 %v406
    %424 = vmatmul.bf16.gmra.mxu0 %v411
    %v425 = vpop.f32.mrf.mxu0
    %v426 = vadd.f32 0.0, %v425
    %v427 = vpop.f32.mrf.mxu0
    %v428 = vadd.f32 0.0, %v427
    %429 = vmatmul.bf16.gmra.mxu0 %v414
    %v430 = vpop.f32.mrf.mxu0
    %v431 = vadd.f32 0.0, %v430
    %v432 = vpop.f32.mrf.mxu0
    %v433 = vadd.f32 0.0, %v432
    %434 = vdwg.mxu0
    %v439 = vunpack.c.l.b16 %v387
    %v440 = vunpack.c.l.b16 %v388
    %v441 = vunpack.c.l.b16 %v389
    %v442 = vunpack.c.l.b16 %v390
    %v443 = vpack.c.b16 %v440, %v439
    %v444 = vpack.c.b16 %v442, %v441
    %v448 = vsel %vm229, %v384, 0
    %v451 = vsel %vm229, %v385, 0
    %453 = vmatpush.bf16.msra.mxu0 0
    %454 = vmatpush.bf16.msra.mxu0 0
    %455 = vmatpush.bf16.msra.mxu0 0
    %456 = vmatpush.bf16.msra.mxu0 0
    %457 = vmatpush.bf16.msra.mxu0 0
    %458 = vmatpush.bf16.msra.mxu0 0
    %459 = vmatpush.bf16.msra.mxu0 %v444
    %460 = vmatpush.bf16.msra.mxu0 %v443
    %461 = vmatmul.bf16.gmra.mxu0 %v448
    %v462 = vpop.f32.mrf.mxu0
    %v463 = vadd.f32 %v426, %v462
    %v464 = vpop.f32.mrf.mxu0
    %v465 = vadd.f32 %v428, %v464
    %466 = vmatmul.bf16.gmra.mxu0 %v451
    %v467 = vpop.f32.mrf.mxu0
    %v468 = vadd.f32 %v431, %v467
    %v469 = vpop.f32.mrf.mxu0
    %v470 = vadd.f32 %v433, %v469
    %471 = vdwg.mxu0
    %s472 = scalar_lea.vmem %s4, 1
    %v473 = vld [vmem:[%s472] sm:$0x1]
    %v475 = vperm.slane %v473, 0
    %v477 = vadd.f32 %v463, %v475
    %v478 = vadd.f32 %v465, %v475
    %v479 = vadd.f32 %v468, %v475
    %v480 = vadd.f32 %v470, %v475
    %v481 = vmax.f32 %v477, 0.0
    %v482 = vmax.f32 %v478, 0.0
    %v483 = vmax.f32 %v479, 0.0
    %v484 = vmax.f32 %v480, 0.0
    %v485 = vpack.c.bf16 %v482, %v481
    %v486 = vpack.c.bf16 %v484, %v483
    %s487 = scalar_lea.vmem [#allocation5], 16
    %v488 = vld [vmem:[%s487] sm:$0xf]
    %v489 = vld [vmem:[%s487 + $0x4] sm:$0xf]
    %v490 = vld [vmem:[%s487 + $0x8] sm:$0xf]
    %v491 = vld [vmem:[%s487 + $0xc] sm:$0xf]
    %s492 = scalar_lea.vmem %s6, 1
    %v493 = vld [vmem:[%s492] sm:$0x1]
    %v495 = vperm.slane %v493, 0
    %v501 = vunpack.c.l.b16 %v488
    %v502 = vunpack.c.l.b16 %v489
    %v503 = vunpack.c.l.b16 %v490
    %v504 = vunpack.c.l.b16 %v491
    %v505 = vpack.c.b16 %v502, %v501
    %v506 = vpack.c.b16 %v504, %v503
    %v510 = vsel %vm229, %v485, 0
    %v513 = vsel %vm229, %v486, 0
    %515 = vmatpush.bf16.msra.mxu0 0
    %516 = vmatpush.bf16.msra.mxu0 0
    %517 = vmatpush.bf16.msra.mxu0 0
    %518 = vmatpush.bf16.msra.mxu0 0
    %519 = vmatpush.bf16.msra.mxu0 0
    %520 = vmatpush.bf16.msra.mxu0 0
    %521 = vmatpush.bf16.msra.mxu0 %v506
    %522 = vmatpush.bf16.msra.mxu0 %v505
    %523 = vmatmul.bf16.gmra.mxu0 %v510
    %v524 = vpop.f32.mrf.mxu0
    %v525 = vadd.f32 %v495, %v524
    %v526 = vpop.f32.mrf.mxu0
    %v527 = vadd.f32 %v495, %v526
    %528 = vmatmul.bf16.gmra.mxu0 %v513
    %v529 = vpop.f32.mrf.mxu0
    %v530 = vadd.f32 %v495, %v529
    %v531 = vpop.f32.mrf.mxu0
    %v532 = vadd.f32 %v495, %v531
    %533 = vdwg.mxu0
    %v534 = vadd.f32 %v351, %v525
    %v535 = vadd.f32 %v352, %v527
    %v536 = vadd.f32 %v353, %v530
    %v537 = vadd.f32 %v354, %v532
    %v538 = vadd.f32 %v355, %v525
    %v539 = vadd.f32 %v356, %v527
    %v540 = vadd.f32 %v357, %v530
    %v541 = vadd.f32 %v358, %v532
    %v542 = vrot.slane %v534, 6
    %v543 = vrot.slane %v535, 6
    %v544 = vrot.slane %v536, 6
    %v545 = vrot.slane %v537, 6
    %vm546 = vcmp.lt.s32.totalorder %v123, 2
    %v547 = vsel %vm546, %v544, %v545
    %v548 = vsel %vm546, %v543, %v544
    %v549 = vsel %vm546, %v542, %v543
    %v550 = vsel %vm546, %v545, %v542
    %v551 = vsel %vm183, %v550, 0.0
    %v552 = vsel %vm184, %v549, 0.0
    %v553 = vsel %vm185, %v548, 0.0
    %v554 = vsel %vm186, %v547, 0.0
    %v555 = vrot.slane %v534, 2
    %v556 = vrot.slane %v535, 2
    %v557 = vrot.slane %v536, 2
    %v558 = vrot.slane %v537, 2
    %vm559 = vcmp.lt.s32.totalorder %v123, 6
    %v560 = vsel %vm559, %v557, %v558
    %v561 = vsel %vm559, %v556, %v557
    %v562 = vsel %vm559, %v555, %v556
    %v563 = vsel %vm559, %v558, %v555
    %v564 = vsel %vm187, %v562, 0.0
    %v565 = vsel %vm188, %v561, 0.0
    %v566 = vsel %vm189, %v560, 0.0
    %v567 = vsel %vm190, %v563, 0.0
    %v568 = vpack.c.bf16 %v552, %v551
    %v569 = vpack.c.bf16 %v554, %v553
    %s570 = scalar_lea.vmem [#allocation3], 64
    %v571 = vld [vmem:[%s570] sm:$0xf]
    %v572 = vld [vmem:[%s570 + $0x4] sm:$0xf]
    %v573 = vld [vmem:[%s570 + $0x8] sm:$0xf]
    %v574 = vld [vmem:[%s570 + $0xc] sm:$0xf]
    %v575 = vpack.c.bf16 %v565, %v564
    %v576 = vpack.c.bf16 %v567, %v566
    %s577 = scalar_lea.vmem [#allocation3], 80
    %v578 = vld [vmem:[%s577] sm:$0xf]
    %v579 = vld [vmem:[%s577 + $0x4] sm:$0xf]
    %v580 = vld [vmem:[%s577 + $0x8] sm:$0xf]
    %v581 = vld [vmem:[%s577 + $0xc] sm:$0xf]
    %v586 = vunpack.c.l.b16 %v578
    %v587 = vunpack.c.l.b16 %v579
    %v588 = vunpack.c.l.b16 %v580
    %v589 = vunpack.c.l.b16 %v581
    %v590 = vpack.c.b16 %v587, %v586
    %v591 = vpack.c.b16 %v589, %v588
    %v595 = vsel %vm229, %v575, 0
    %v598 = vsel %vm229, %v576, 0
    %600 = vmatpush.bf16.msra.mxu0 0
    %601 = vmatpush.bf16.msra.mxu0 0
    %602 = vmatpush.bf16.msra.mxu0 0
    %603 = vmatpush.bf16.msra.mxu0 0
    %604 = vmatpush.bf16.msra.mxu0 0
    %605 = vmatpush.bf16.msra.mxu0 0
    %606 = vmatpush.bf16.msra.mxu0 %v591
    %607 = vmatpush.bf16.msra.mxu0 %v590
    %608 = vmatmul.bf16.gmra.mxu0 %v595
    %v609 = vpop.f32.mrf.mxu0
    %v610 = vadd.f32 0.0, %v609
    %v611 = vpop.f32.mrf.mxu0
    %v612 = vadd.f32 0.0, %v611
    %613 = vmatmul.bf16.gmra.mxu0 %v598
    %v614 = vpop.f32.mrf.mxu0
    %v615 = vadd.f32 0.0, %v614
    %v616 = vpop.f32.mrf.mxu0
    %v617 = vadd.f32 0.0, %v616
    %618 = vdwg.mxu0
    %v623 = vunpack.c.l.b16 %v571
    %v624 = vunpack.c.l.b16 %v572
    %v625 = vunpack.c.l.b16 %v573
    %v626 = vunpack.c.l.b16 %v574
    %v627 = vpack.c.b16 %v624, %v623
    %v628 = vpack.c.b16 %v626, %v625
    %v632 = vsel %vm229, %v568, 0
    %v635 = vsel %vm229, %v569, 0
    %637 = vmatpush.bf16.msra.mxu0 0
    %638 = vmatpush.bf16.msra.mxu0 0
    %639 = vmatpush.bf16.msra.mxu0 0
    %640 = vmatpush.bf16.msra.mxu0 0
    %641 = vmatpush.bf16.msra.mxu0 0
    %642 = vmatpush.bf16.msra.mxu0 0
    %643 = vmatpush.bf16.msra.mxu0 %v628
    %644 = vmatpush.bf16.msra.mxu0 %v627
    %645 = vmatmul.bf16.gmra.mxu0 %v632
    %v646 = vpop.f32.mrf.mxu0
    %v647 = vadd.f32 %v610, %v646
    %v648 = vpop.f32.mrf.mxu0
    %v649 = vadd.f32 %v612, %v648
    %650 = vmatmul.bf16.gmra.mxu0 %v635
    %v651 = vpop.f32.mrf.mxu0
    %v652 = vadd.f32 %v615, %v651
    %v653 = vpop.f32.mrf.mxu0
    %v654 = vadd.f32 %v617, %v653
    %655 = vdwg.mxu0
    %s656 = scalar_lea.vmem %s4, 2
    %v657 = vld [vmem:[%s656] sm:$0x1]
    %v659 = vperm.slane %v657, 0
    %v661 = vadd.f32 %v647, %v659
    %v662 = vadd.f32 %v649, %v659
    %v663 = vadd.f32 %v652, %v659
    %v664 = vadd.f32 %v654, %v659
    %v665 = vmax.f32 %v661, 0.0
    %v666 = vmax.f32 %v662, 0.0
    %v667 = vmax.f32 %v663, 0.0
    %v668 = vmax.f32 %v664, 0.0
    %v669 = vpack.c.bf16 %v666, %v665
    %v670 = vpack.c.bf16 %v668, %v667
    %s671 = scalar_lea.vmem [#allocation5], 32
    %v672 = vld [vmem:[%s671] sm:$0xf]
    %v673 = vld [vmem:[%s671 + $0x4] sm:$0xf]
    %v674 = vld [vmem:[%s671 + $0x8] sm:$0xf]
    %v675 = vld [vmem:[%s671 + $0xc] sm:$0xf]
    %s676 = scalar_lea.vmem %s6, 2
    %v677 = vld [vmem:[%s676] sm:$0x1]
    %v679 = vperm.slane %v677, 0
    %v685 = vunpack.c.l.b16 %v672
    %v686 = vunpack.c.l.b16 %v673
    %v687 = vunpack.c.l.b16 %v674
    %v688 = vunpack.c.l.b16 %v675
    %v689 = vpack.c.b16 %v686, %v685
    %v690 = vpack.c.b16 %v688, %v687
    %v694 = vsel %vm229, %v669, 0
    %v697 = vsel %vm229, %v670, 0
    %699 = vmatpush.bf16.msra.mxu0 0
    %700 = vmatpush.bf16.msra.mxu0 0
    %701 = vmatpush.bf16.msra.mxu0 0
    %702 = vmatpush.bf16.msra.mxu0 0
    %703 = vmatpush.bf16.msra.mxu0 0
    %704 = vmatpush.bf16.msra.mxu0 0
    %705 = vmatpush.bf16.msra.mxu0 %v690
    %706 = vmatpush.bf16.msra.mxu0 %v689
    %707 = vmatmul.bf16.gmra.mxu0 %v694
    %v708 = vpop.f32.mrf.mxu0
    %v709 = vadd.f32 %v679, %v708
    %v710 = vpop.f32.mrf.mxu0
    %v711 = vadd.f32 %v679, %v710
    %712 = vmatmul.bf16.gmra.mxu0 %v697
    %v713 = vpop.f32.mrf.mxu0
    %v714 = vadd.f32 %v679, %v713
    %v715 = vpop.f32.mrf.mxu0
    %v716 = vadd.f32 %v679, %v715
    %717 = vdwg.mxu0
    %v718 = vadd.f32 %v534, %v709
    %v719 = vadd.f32 %v535, %v711
    %v720 = vadd.f32 %v536, %v714
    %v721 = vadd.f32 %v537, %v716
    %v722 = vadd.f32 %v538, %v709
    %v723 = vadd.f32 %v539, %v711
    %v724 = vadd.f32 %v540, %v714
    %v725 = vadd.f32 %v541, %v716
    %v726 = vrot.slane %v718, 1
    %v727 = vrot.slane %v719, 1
    %v728 = vrot.slane %v720, 1
    %v729 = vrot.slane %v721, 1
    %v730 = vsel %vm195, %v728, %v729
    %v731 = vsel %vm195, %v727, %v728
    %v732 = vsel %vm195, %v726, %v727
    %v733 = vsel %vm195, %v729, %v726
    %v734 = vsel %vm175, %v732, 0.0
    %v735 = vsel %vm176, %v731, 0.0
    %v736 = vsel %vm177, %v730, 0.0
    %v737 = vsel %vm178, %v733, 0.0
    %v738 = vpack.c.bf16 %v719, %v718
    %v739 = vpack.c.bf16 %v721, %v720
    %s740 = scalar_lea.vmem [#allocation3], 96
    %v741 = vld [vmem:[%s740] sm:$0xf]
    %v742 = vld [vmem:[%s740 + $0x4] sm:$0xf]
    %v743 = vld [vmem:[%s740 + $0x8] sm:$0xf]
    %v744 = vld [vmem:[%s740 + $0xc] sm:$0xf]
    %v745 = vpack.c.bf16 %v735, %v734
    %v746 = vpack.c.bf16 %v737, %v736
    %s747 = scalar_lea.vmem [#allocation3], 112
    %v748 = vld [vmem:[%s747] sm:$0xf]
    %v749 = vld [vmem:[%s747 + $0x4] sm:$0xf]
    %v750 = vld [vmem:[%s747 + $0x8] sm:$0xf]
    %v751 = vld [vmem:[%s747 + $0xc] sm:$0xf]
    %v756 = vunpack.c.l.b16 %v748
    %v757 = vunpack.c.l.b16 %v749
    %v758 = vunpack.c.l.b16 %v750
    %v759 = vunpack.c.l.b16 %v751
    %v760 = vpack.c.b16 %v757, %v756
    %v761 = vpack.c.b16 %v759, %v758
    %v765 = vsel %vm229, %v745, 0
    %v768 = vsel %vm229, %v746, 0
    %770 = vmatpush.bf16.msra.mxu0 0
    %771 = vmatpush.bf16.msra.mxu0 0
    %772 = vmatpush.bf16.msra.mxu0 0
    %773 = vmatpush.bf16.msra.mxu0 0
    %774 = vmatpush.bf16.msra.mxu0 0
    %775 = vmatpush.bf16.msra.mxu0 0
    %776 = vmatpush.bf16.msra.mxu0 %v761
    %777 = vmatpush.bf16.msra.mxu0 %v760
    %778 = vmatmul.bf16.gmra.mxu0 %v765
    %v779 = vpop.f32.mrf.mxu0
    %v780 = vadd.f32 0.0, %v779
    %v781 = vpop.f32.mrf.mxu0
    %v782 = vadd.f32 0.0, %v781
    %783 = vmatmul.bf16.gmra.mxu0 %v768
    %v784 = vpop.f32.mrf.mxu0
    %v785 = vadd.f32 0.0, %v784
    %v786 = vpop.f32.mrf.mxu0
    %v787 = vadd.f32 0.0, %v786
    %788 = vdwg.mxu0
    %v793 = vunpack.c.l.b16 %v741
    %v794 = vunpack.c.l.b16 %v742
    %v795 = vunpack.c.l.b16 %v743
    %v796 = vunpack.c.l.b16 %v744
    %v797 = vpack.c.b16 %v794, %v793
    %v798 = vpack.c.b16 %v796, %v795
    %v802 = vsel %vm229, %v738, 0
    %v805 = vsel %vm229, %v739, 0
    %807 = vmatpush.bf16.msra.mxu0 0
    %808 = vmatpush.bf16.msra.mxu0 0
    %809 = vmatpush.bf16.msra.mxu0 0
    %810 = vmatpush.bf16.msra.mxu0 0
    %811 = vmatpush.bf16.msra.mxu0 0
    %812 = vmatpush.bf16.msra.mxu0 0
    %813 = vmatpush.bf16.msra.mxu0 %v798
    %814 = vmatpush.bf16.msra.mxu0 %v797
    %815 = vmatmul.bf16.gmra.mxu0 %v802
    %v816 = vpop.f32.mrf.mxu0
    %v817 = vadd.f32 %v780, %v816
    %v818 = vpop.f32.mrf.mxu0
    %v819 = vadd.f32 %v782, %v818
    %820 = vmatmul.bf16.gmra.mxu0 %v805
    %v821 = vpop.f32.mrf.mxu0
    %v822 = vadd.f32 %v785, %v821
    %v823 = vpop.f32.mrf.mxu0
    %v824 = vadd.f32 %v787, %v823
    %825 = vdwg.mxu0
    %s826 = scalar_lea.vmem %s4, 3
    %v827 = vld [vmem:[%s826] sm:$0x1]
    %v829 = vperm.slane %v827, 0
    %v831 = vadd.f32 %v817, %v829
    %v832 = vadd.f32 %v819, %v829
    %v833 = vadd.f32 %v822, %v829
    %v834 = vadd.f32 %v824, %v829
    %v835 = vmax.f32 %v831, 0.0
    %v836 = vmax.f32 %v832, 0.0
    %v837 = vmax.f32 %v833, 0.0
    %v838 = vmax.f32 %v834, 0.0
    %v839 = vpack.c.bf16 %v836, %v835
    %v840 = vpack.c.bf16 %v838, %v837
    %s841 = scalar_lea.vmem [#allocation5], 48
    %v842 = vld [vmem:[%s841] sm:$0xf]
    %v843 = vld [vmem:[%s841 + $0x4] sm:$0xf]
    %v844 = vld [vmem:[%s841 + $0x8] sm:$0xf]
    %v845 = vld [vmem:[%s841 + $0xc] sm:$0xf]
    %s846 = scalar_lea.vmem %s6, 3
    %v847 = vld [vmem:[%s846] sm:$0x1]
    %v849 = vperm.slane %v847, 0
    %v855 = vunpack.c.l.b16 %v842
    %v856 = vunpack.c.l.b16 %v843
    %v857 = vunpack.c.l.b16 %v844
    %v858 = vunpack.c.l.b16 %v845
    %v859 = vpack.c.b16 %v856, %v855
    %v860 = vpack.c.b16 %v858, %v857
    %v864 = vsel %vm229, %v839, 0
    %v867 = vsel %vm229, %v840, 0
    %869 = vmatpush.bf16.msra.mxu0 0
    %870 = vmatpush.bf16.msra.mxu0 0
    %871 = vmatpush.bf16.msra.mxu0 0
    %872 = vmatpush.bf16.msra.mxu0 0
    %873 = vmatpush.bf16.msra.mxu0 0
    %874 = vmatpush.bf16.msra.mxu0 0
    %875 = vmatpush.bf16.msra.mxu0 %v860
    %876 = vmatpush.bf16.msra.mxu0 %v859
    %877 = vmatmul.bf16.gmra.mxu0 %v864
    %v878 = vpop.f32.mrf.mxu0
    %v879 = vadd.f32 %v849, %v878
    %v880 = vpop.f32.mrf.mxu0
    %v881 = vadd.f32 %v849, %v880
    %882 = vmatmul.bf16.gmra.mxu0 %v867
    %v883 = vpop.f32.mrf.mxu0
    %v884 = vadd.f32 %v849, %v883
    %v885 = vpop.f32.mrf.mxu0
    %v886 = vadd.f32 %v849, %v885
    %887 = vdwg.mxu0
    %v888 = vadd.f32 %v718, %v879
    %v889 = vadd.f32 %v719, %v881
    %v890 = vadd.f32 %v720, %v884
    %v891 = vadd.f32 %v721, %v886
    %v892 = vadd.f32 %v722, %v879
    %v893 = vadd.f32 %v723, %v881
    %v894 = vadd.f32 %v724, %v884
    %v895 = vadd.f32 %v725, %v886
    %v896 = vrot.slane %v888, 7
    %v897 = vrot.slane %v889, 7
    %v898 = vrot.slane %v890, 7
    %v899 = vrot.slane %v891, 7
    %v900 = vsel %vm363, %v898, %v899
    %v901 = vsel %vm363, %v897, %v898
    %v902 = vsel %vm363, %v896, %v897
    %v903 = vsel %vm363, %v899, %v896
    %v904 = vsel %vm179, %v903, 0.0
    %v905 = vsel %vm180, %v902, 0.0
    %v906 = vsel %vm181, %v901, 0.0
    %v907 = vsel %vm182, %v900, 0.0
    %v908 = vrot.slane %v888, 1
    %v909 = vrot.slane %v889, 1
    %v910 = vrot.slane %v890, 1
    %v911 = vrot.slane %v891, 1
    %v912 = vsel %vm195, %v910, %v911
    %v913 = vsel %vm195, %v909, %v910
    %v914 = vsel %vm195, %v908, %v909
    %v915 = vsel %vm195, %v911, %v908
    %v916 = vsel %vm175, %v914, 0.0
    %v917 = vsel %vm176, %v913, 0.0
    %v918 = vsel %vm177, %v912, 0.0
    %v919 = vsel %vm178, %v915, 0.0
    %v920 = vpack.c.bf16 %v905, %v904
    %v921 = vpack.c.bf16 %v907, %v906
    %s922 = scalar_lea.vmem [#allocation3], 128
    %v923 = vld [vmem:[%s922] sm:$0xf]
    %v924 = vld [vmem:[%s922 + $0x4] sm:$0xf]
    %v925 = vld [vmem:[%s922 + $0x8] sm:$0xf]
    %v926 = vld [vmem:[%s922 + $0xc] sm:$0xf]
    %v927 = vpack.c.bf16 %v917, %v916
    %v928 = vpack.c.bf16 %v919, %v918
    %s929 = scalar_lea.vmem [#allocation3], 144
    %v930 = vld [vmem:[%s929] sm:$0xf]
    %v931 = vld [vmem:[%s929 + $0x4] sm:$0xf]
    %v932 = vld [vmem:[%s929 + $0x8] sm:$0xf]
    %v933 = vld [vmem:[%s929 + $0xc] sm:$0xf]
    %v938 = vunpack.c.l.b16 %v930
    %v939 = vunpack.c.l.b16 %v931
    %v940 = vunpack.c.l.b16 %v932
    %v941 = vunpack.c.l.b16 %v933
    %v942 = vpack.c.b16 %v939, %v938
    %v943 = vpack.c.b16 %v941, %v940
    %v947 = vsel %vm229, %v927, 0
    %v950 = vsel %vm229, %v928, 0
    %952 = vmatpush.bf16.msra.mxu0 0
    %953 = vmatpush.bf16.msra.mxu0 0
    %954 = vmatpush.bf16.msra.mxu0 0
    %955 = vmatpush.bf16.msra.mxu0 0
    %956 = vmatpush.bf16.msra.mxu0 0
    %957 = vmatpush.bf16.msra.mxu0 0
    %958 = vmatpush.bf16.msra.mxu0 %v943
    %959 = vmatpush.bf16.msra.mxu0 %v942
    %960 = vmatmul.bf16.gmra.mxu0 %v947
    %v961 = vpop.f32.mrf.mxu0
    %v962 = vadd.f32 0.0, %v961
    %v963 = vpop.f32.mrf.mxu0
    %v964 = vadd.f32 0.0, %v963
    %965 = vmatmul.bf16.gmra.mxu0 %v950
    %v966 = vpop.f32.mrf.mxu0
    %v967 = vadd.f32 0.0, %v966
    %v968 = vpop.f32.mrf.mxu0
    %v969 = vadd.f32 0.0, %v968
    %970 = vdwg.mxu0
    %v975 = vunpack.c.l.b16 %v923
    %v976 = vunpack.c.l.b16 %v924
    %v977 = vunpack.c.l.b16 %v925
    %v978 = vunpack.c.l.b16 %v926
    %v979 = vpack.c.b16 %v976, %v975
    %v980 = vpack.c.b16 %v978, %v977
    %v984 = vsel %vm229, %v920, 0
    %v987 = vsel %vm229, %v921, 0
    %989 = vmatpush.bf16.msra.mxu0 0
    %990 = vmatpush.bf16.msra.mxu0 0
    %991 = vmatpush.bf16.msra.mxu0 0
    %992 = vmatpush.bf16.msra.mxu0 0
    %993 = vmatpush.bf16.msra.mxu0 0
    %994 = vmatpush.bf16.msra.mxu0 0
    %995 = vmatpush.bf16.msra.mxu0 %v980
    %996 = vmatpush.bf16.msra.mxu0 %v979
    %997 = vmatmul.bf16.gmra.mxu0 %v984
    %v998 = vpop.f32.mrf.mxu0
    %v999 = vadd.f32 %v962, %v998
    %v1000 = vpop.f32.mrf.mxu0
    %v1001 = vadd.f32 %v964, %v1000
    %1002 = vmatmul.bf16.gmra.mxu0 %v987
    %v1003 = vpop.f32.mrf.mxu0
    %v1004 = vadd.f32 %v967, %v1003
    %v1005 = vpop.f32.mrf.mxu0
    %v1006 = vadd.f32 %v969, %v1005
    %1007 = vdwg.mxu0
    %s1008 = scalar_lea.vmem %s4, 4
    %v1009 = vld [vmem:[%s1008] sm:$0x1]
    %v1011 = vperm.slane %v1009, 0
    %v1013 = vadd.f32 %v999, %v1011
    %v1014 = vadd.f32 %v1001, %v1011
    %v1015 = vadd.f32 %v1004, %v1011
    %v1016 = vadd.f32 %v1006, %v1011
    %v1017 = vmax.f32 %v1013, 0.0
    %v1018 = vmax.f32 %v1014, 0.0
    %v1019 = vmax.f32 %v1015, 0.0
    %v1020 = vmax.f32 %v1016, 0.0
    %v1021 = vpack.c.bf16 %v1018, %v1017
    %v1022 = vpack.c.bf16 %v1020, %v1019
    %s1023 = scalar_lea.vmem [#allocation5], 64
    %v1024 = vld [vmem:[%s1023] sm:$0xf]
    %v1025 = vld [vmem:[%s1023 + $0x4] sm:$0xf]
    %v1026 = vld [vmem:[%s1023 + $0x8] sm:$0xf]
    %v1027 = vld [vmem:[%s1023 + $0xc] sm:$0xf]
    %s1028 = scalar_lea.vmem %s6, 4
    %v1029 = vld [vmem:[%s1028] sm:$0x1]
    %v1031 = vperm.slane %v1029, 0
    %v1037 = vunpack.c.l.b16 %v1024
    %v1038 = vunpack.c.l.b16 %v1025
    %v1039 = vunpack.c.l.b16 %v1026
    %v1040 = vunpack.c.l.b16 %v1027
    %v1041 = vpack.c.b16 %v1038, %v1037
    %v1042 = vpack.c.b16 %v1040, %v1039
    %v1046 = vsel %vm229, %v1021, 0
    %v1049 = vsel %vm229, %v1022, 0
    %1051 = vmatpush.bf16.msra.mxu0 0
    %1052 = vmatpush.bf16.msra.mxu0 0
    %1053 = vmatpush.bf16.msra.mxu0 0
    %1054 = vmatpush.bf16.msra.mxu0 0
    %1055 = vmatpush.bf16.msra.mxu0 0
    %1056 = vmatpush.bf16.msra.mxu0 0
    %1057 = vmatpush.bf16.msra.mxu0 %v1042
    %1058 = vmatpush.bf16.msra.mxu0 %v1041
    %1059 = vmatmul.bf16.gmra.mxu0 %v1046
    %v1060 = vpop.f32.mrf.mxu0
    %v1061 = vadd.f32 %v1031, %v1060
    %v1062 = vpop.f32.mrf.mxu0
    %v1063 = vadd.f32 %v1031, %v1062
    %1064 = vmatmul.bf16.gmra.mxu0 %v1049
    %v1065 = vpop.f32.mrf.mxu0
    %v1066 = vadd.f32 %v1031, %v1065
    %v1067 = vpop.f32.mrf.mxu0
    %v1068 = vadd.f32 %v1031, %v1067
    %1069 = vdwg.mxu0
    %v1070 = vadd.f32 %v888, %v1061
    %v1071 = vadd.f32 %v889, %v1063
    %v1072 = vadd.f32 %v890, %v1066
    %v1073 = vadd.f32 %v891, %v1068
    %v1074 = vadd.f32 %v892, %v1061
    %v1075 = vadd.f32 %v893, %v1063
    %v1076 = vadd.f32 %v894, %v1066
    %v1077 = vadd.f32 %v895, %v1068
    %v1078 = vrot.slane %v1070, 6
    %v1079 = vrot.slane %v1071, 6
    %v1080 = vrot.slane %v1072, 6
    %v1081 = vrot.slane %v1073, 6
    %v1082 = vsel %vm546, %v1080, %v1081
    %v1083 = vsel %vm546, %v1079, %v1080
    %v1084 = vsel %vm546, %v1078, %v1079
    %v1085 = vsel %vm546, %v1081, %v1078
    %v1086 = vsel %vm183, %v1085, 0.0
    %v1087 = vsel %vm184, %v1084, 0.0
    %v1088 = vsel %vm185, %v1083, 0.0
    %v1089 = vsel %vm186, %v1082, 0.0
    %v1090 = vrot.slane %v1070, 2
    %v1091 = vrot.slane %v1071, 2
    %v1092 = vrot.slane %v1072, 2
    %v1093 = vrot.slane %v1073, 2
    %v1094 = vsel %vm559, %v1092, %v1093
    %v1095 = vsel %vm559, %v1091, %v1092
    %v1096 = vsel %vm559, %v1090, %v1091
    %v1097 = vsel %vm559, %v1093, %v1090
    %v1098 = vsel %vm187, %v1096, 0.0
    %v1099 = vsel %vm188, %v1095, 0.0
    %v1100 = vsel %vm189, %v1094, 0.0
    %v1101 = vsel %vm190, %v1097, 0.0
    %v1102 = vpack.c.bf16 %v1087, %v1086
    %v1103 = vpack.c.bf16 %v1089, %v1088
    %s1104 = scalar_lea.vmem [#allocation3], 160
    %v1105 = vld [vmem:[%s1104] sm:$0xf]
    %v1106 = vld [vmem:[%s1104 + $0x4] sm:$0xf]
    %v1107 = vld [vmem:[%s1104 + $0x8] sm:$0xf]
    %v1108 = vld [vmem:[%s1104 + $0xc] sm:$0xf]
    %v1109 = vpack.c.bf16 %v1099, %v1098
    %v1110 = vpack.c.bf16 %v1101, %v1100
    %s1111 = scalar_lea.vmem [#allocation3], 176
    %v1112 = vld [vmem:[%s1111] sm:$0xf]
    %v1113 = vld [vmem:[%s1111 + $0x4] sm:$0xf]
    %v1114 = vld [vmem:[%s1111 + $0x8] sm:$0xf]
    %v1115 = vld [vmem:[%s1111 + $0xc] sm:$0xf]
    %v1120 = vunpack.c.l.b16 %v1112
    %v1121 = vunpack.c.l.b16 %v1113
    %v1122 = vunpack.c.l.b16 %v1114
    %v1123 = vunpack.c.l.b16 %v1115
    %v1124 = vpack.c.b16 %v1121, %v1120
    %v1125 = vpack.c.b16 %v1123, %v1122
    %v1129 = vsel %vm229, %v1109, 0
    %v1132 = vsel %vm229, %v1110, 0
    %1134 = vmatpush.bf16.msra.mxu0 0
    %1135 = vmatpush.bf16.msra.mxu0 0
    %1136 = vmatpush.bf16.msra.mxu0 0
    %1137 = vmatpush.bf16.msra.mxu0 0
    %1138 = vmatpush.bf16.msra.mxu0 0
    %1139 = vmatpush.bf16.msra.mxu0 0
    %1140 = vmatpush.bf16.msra.mxu0 %v1125
    %1141 = vmatpush.bf16.msra.mxu0 %v1124
    %1142 = vmatmul.bf16.gmra.mxu0 %v1129
    %v1143 = vpop.f32.mrf.mxu0
    %v1144 = vadd.f32 0.0, %v1143
    %v1145 = vpop.f32.mrf.mxu0
    %v1146 = vadd.f32 0.0, %v1145
    %1147 = vmatmul.bf16.gmra.mxu0 %v1132
    %v1148 = vpop.f32.mrf.mxu0
    %v1149 = vadd.f32 0.0, %v1148
    %v1150 = vpop.f32.mrf.mxu0
    %v1151 = vadd.f32 0.0, %v1150
    %1152 = vdwg.mxu0
    %v1157 = vunpack.c.l.b16 %v1105
    %v1158 = vunpack.c.l.b16 %v1106
    %v1159 = vunpack.c.l.b16 %v1107
    %v1160 = vunpack.c.l.b16 %v1108
    %v1161 = vpack.c.b16 %v1158, %v1157
    %v1162 = vpack.c.b16 %v1160, %v1159
    %v1166 = vsel %vm229, %v1102, 0
    %v1169 = vsel %vm229, %v1103, 0
    %1171 = vmatpush.bf16.msra.mxu0 0
    %1172 = vmatpush.bf16.msra.mxu0 0
    %1173 = vmatpush.bf16.msra.mxu0 0
    %1174 = vmatpush.bf16.msra.mxu0 0
    %1175 = vmatpush.bf16.msra.mxu0 0
    %1176 = vmatpush.bf16.msra.mxu0 0
    %1177 = vmatpush.bf16.msra.mxu0 %v1162
    %1178 = vmatpush.bf16.msra.mxu0 %v1161
    %1179 = vmatmul.bf16.gmra.mxu0 %v1166
    %v1180 = vpop.f32.mrf.mxu0
    %v1181 = vadd.f32 %v1144, %v1180
    %v1182 = vpop.f32.mrf.mxu0
    %v1183 = vadd.f32 %v1146, %v1182
    %1184 = vmatmul.bf16.gmra.mxu0 %v1169
    %v1185 = vpop.f32.mrf.mxu0
    %v1186 = vadd.f32 %v1149, %v1185
    %v1187 = vpop.f32.mrf.mxu0
    %v1188 = vadd.f32 %v1151, %v1187
    %1189 = vdwg.mxu0
    %s1190 = scalar_lea.vmem %s4, 5
    %v1191 = vld [vmem:[%s1190] sm:$0x1]
    %v1193 = vperm.slane %v1191, 0
    %v1195 = vadd.f32 %v1181, %v1193
    %v1196 = vadd.f32 %v1183, %v1193
    %v1197 = vadd.f32 %v1186, %v1193
    %v1198 = vadd.f32 %v1188, %v1193
    %v1199 = vmax.f32 %v1195, 0.0
    %v1200 = vmax.f32 %v1196, 0.0
    %v1201 = vmax.f32 %v1197, 0.0
    %v1202 = vmax.f32 %v1198, 0.0
    %v1203 = vpack.c.bf16 %v1200, %v1199
    %v1204 = vpack.c.bf16 %v1202, %v1201
    %s1205 = scalar_lea.vmem [#allocation5], 80
    %v1206 = vld [vmem:[%s1205] sm:$0xf]
    %v1207 = vld [vmem:[%s1205 + $0x4] sm:$0xf]
    %v1208 = vld [vmem:[%s1205 + $0x8] sm:$0xf]
    %v1209 = vld [vmem:[%s1205 + $0xc] sm:$0xf]
    %s1210 = scalar_lea.vmem %s6, 5
    %v1211 = vld [vmem:[%s1210] sm:$0x1]
    %v1213 = vperm.slane %v1211, 0
    %v1219 = vunpack.c.l.b16 %v1206
    %v1220 = vunpack.c.l.b16 %v1207
    %v1221 = vunpack.c.l.b16 %v1208
    %v1222 = vunpack.c.l.b16 %v1209
    %v1223 = vpack.c.b16 %v1220, %v1219
    %v1224 = vpack.c.b16 %v1222, %v1221
    %v1228 = vsel %vm229, %v1203, 0
    %v1231 = vsel %vm229, %v1204, 0
    %1233 = vmatpush.bf16.msra.mxu0 0
    %1234 = vmatpush.bf16.msra.mxu0 0
    %1235 = vmatpush.bf16.msra.mxu0 0
    %1236 = vmatpush.bf16.msra.mxu0 0
    %1237 = vmatpush.bf16.msra.mxu0 0
    %1238 = vmatpush.bf16.msra.mxu0 0
    %1239 = vmatpush.bf16.msra.mxu0 %v1224
    %1240 = vmatpush.bf16.msra.mxu0 %v1223
    %1241 = vmatmul.bf16.gmra.mxu0 %v1228
    %v1242 = vpop.f32.mrf.mxu0
    %v1243 = vadd.f32 %v1213, %v1242
    %v1244 = vpop.f32.mrf.mxu0
    %v1245 = vadd.f32 %v1213, %v1244
    %1246 = vmatmul.bf16.gmra.mxu0 %v1231
    %v1247 = vpop.f32.mrf.mxu0
    %v1248 = vadd.f32 %v1213, %v1247
    %v1249 = vpop.f32.mrf.mxu0
    %v1250 = vadd.f32 %v1213, %v1249
    %1251 = vdwg.mxu0
    %v1252 = vadd.f32 %v1074, %v1243
    %v1253 = vadd.f32 %v1075, %v1245
    %v1254 = vadd.f32 %v1076, %v1248
    %v1255 = vadd.f32 %v1077, %v1250
    %v1256 = vmax.f32 %v1252, 0.0
    %v1257 = vmax.f32 %v1253, 0.0
    %v1258 = vmax.f32 %v1254, 0.0
    %v1259 = vmax.f32 %v1255, 0.0
    %v1260 = vpack.c.bf16 %v1257, %v1256
    %v1261 = vpack.c.bf16 %v1259, %v1258
    %v1262 = vld [vmem:[%s7] sm:$0xf]
    %v1263 = vld [vmem:[%s7 + $0x4] sm:$0xf]
    %v1264 = vld [vmem:[%s7 + $0x8] sm:$0xf]
    %v1265 = vld [vmem:[%s7 + $0xc] sm:$0xf]
    %v1266 = vld [vmem:[%s8] sm:$0x1]
    %v1268 = vperm.slane %v1266, 0
    %1272 = vrot.lane.b32.xlu0 %v1260, 96
    %v1273 = vpop.permute.xlu0 %1272
    %1274 = vrot.lane.b32.xlu0 %v1261, 96
    %v1275 = vpop.permute.xlu0 %1274
    %v1280 = vunpack.c.l.b16 %v1262
    %v1281 = vunpack.c.l.b16 %v1263
    %v1282 = vunpack.c.l.b16 %v1264
    %v1283 = vunpack.c.l.b16 %v1265
    %v1284 = vpack.c.b16 %v1281, %v1280
    %v1285 = vpack.c.b16 %v1283, %v1282
    %v1289 = vsel %vm229, %v1273, 0
    %v1292 = vsel %vm229, %v1275, 0
    %1294 = vmatpush.bf16.msra.mxu0 0
    %1295 = vmatpush.bf16.msra.mxu0 0
    %1296 = vmatpush.bf16.msra.mxu0 0
    %1297 = vmatpush.bf16.msra.mxu0 0
    %1298 = vmatpush.bf16.msra.mxu0 0
    %1299 = vmatpush.bf16.msra.mxu0 0
    %1300 = vmatpush.bf16.msra.mxu0 %v1285
    %1301 = vmatpush.bf16.msra.mxu0 %v1284
    %1302 = vmatmul.bf16.gmra.mxu0 %v1289
    %v1303 = vpop.f32.mrf.mxu0
    %v1304 = vadd.f32 %v1268, %v1303
    %v1305 = vpop.f32.mrf.mxu0
    %v1306 = vadd.f32 %v1268, %v1305
    %1307 = vmatmul.bf16.gmra.mxu0 %v1292
    %v1308 = vpop.f32.mrf.mxu0
    %v1309 = vadd.f32 %v1268, %v1308
    %v1310 = vpop.f32.mrf.mxu0
    %v1311 = vadd.f32 %v1268, %v1310
    %1312 = vdwg.mxu0
    %v1313 = vmax.f32 %v1304, 0.0
    %v1314 = vmax.f32 %v1306, 0.0
    %v1315 = vmax.f32 %v1309, 0.0
    %v1316 = vmax.f32 %v1311, 0.0
    %v1317 = vsel %vm229, %v1313, 0.0
    %v1318 = vsel %vm229, %v1314, 0.0
    %v1319 = vadd.f32 %v1317, %v1318
    %v1320 = vrot.slane %v1319, 4
    %v1321 = vadd.f32 %v1319, %v1320
    %v1322 = vrot.slane %v1321, 2
    %v1323 = vadd.f32 %v1321, %v1322
    %v1324 = vrot.slane %v1323, 1
    %v1325 = vadd.f32 %v1323, %v1324
    %v1326 = vsel %vm229, %v1315, 0.0
    %v1327 = vsel %vm229, %v1316, 0.0
    %v1328 = vadd.f32 %v1326, %v1327
    %v1329 = vrot.slane %v1328, 4
    %v1330 = vadd.f32 %v1328, %v1329
    %v1331 = vrot.slane %v1330, 2
    %v1332 = vadd.f32 %v1330, %v1331
    %v1333 = vrot.slane %v1332, 1
    %v1334 = vadd.f32 %v1332, %v1333
    %v1335 = vrcp.pop 16.0
    %v1336 = vmul.f32 16.0, %v1335
    %v1337 = vsub.f32 1.0, %v1336
    %v1338 = vmul.f32 %v1335, %v1337
    %v1339 = vadd.f32 %v1335, %v1338
    %vm1340 = vweird.f32 %v1335
    %v1341 = vsel %vm1340, %v1335, %v1339
    %v1342 = vmul.f32 %v1325, %v1341
    %v1343 = vmul.f32 %v1334, %v1341
    %v1344 = vld [vmem:[%s9] sm:$0xff]
    %v1345 = vld [vmem:[%s9 + $0x8] sm:$0xff]
    %v1346 = vld [vmem:[%s9 + $0x10] sm:$0xff]
    %v1347 = vld [vmem:[%s9 + $0x18] sm:$0xff]
    %v1348 = vld [vmem:[#allocation2] sm:$0x1]
    %v1350 = vperm.slane %v1348, 0
    %vm1354 = vcmask 1041409
    %v1355 = vsel %vm1354, %v1343, %v1342
    %v1356 = vsel %vm229, %v1355, 0
    %1358 = vmatpush.msra.mxu0 0.0
    %1359 = vmatpush.msra.mxu0 0.0
    %1360 = vmatpush.msra.mxu0 0.0
    %1361 = vmatpush.msra.mxu0 0.0
    %1362 = vmatpush.msra.mxu0 0.0
    %1363 = vmatpush.msra.mxu0 0.0
    %1364 = vmatpush.msra.mxu0 0.0
    %1365 = vmatpush.msra.mxu0 0.0
    %1366 = vmatpush.msra.mxu0 0.0
    %1367 = vmatpush.msra.mxu0 0.0
    %1368 = vmatpush.msra.mxu0 0.0
    %1369 = vmatpush.msra.mxu0 0.0
    %1370 = vmatpush.msra.mxu0 %v1347
    %1371 = vmatpush.msra.mxu0 %v1346
    %1372 = vmatpush.msra.mxu0 %v1345
    %1373 = vmatpush.msra.mxu0 %v1344
    %1374 = vmatmul.f32.gmra.mxu0 %v1356
    %v1375 = vpop.f32.mrf.mxu0
    %v1376 = vadd.f32 %v1350, %v1375
    %1377 = vdwg.mxu0
    %vm1378 = vcmask 1024
    %1379 = vst.msk [vmem:[%s11] sm:$0x3] %vm1378, %v1376
    // Predicated region
    $region54: #{tpu_custom_call.1} parent=1 // pred_check
      _
    $region55: #{tpu_custom_call.1} parent=1 // pred_check_branch
      %1381 = sbr.rel (0) target = $region57
    $region56: #{tpu_custom_call.1} parent=1 // pred_region
      _
    $region57: #{tpu_custom_call.1} parent=1 // pred_fallthru
      _
    // Predicated region
    $region58: #{tpu_custom_call.1} parent=1 // pred_check
      _
    $region59: #{tpu_custom_call.1} parent=1 // pred_check_branch
      %1383 = sbr.rel (0) target = $region61
    $region60: #{tpu_custom_call.1} parent=1 // pred_region
      _
    $region61: #{tpu_custom_call.1} parent=1 // pred_fallthru
      _
    %1384 = vsyncpa [#allocation4], 1
    %1385 = vsyncpa [#allocation6], 1

</llo_original>
